<compile_context>
chip_gen: v7x
topology: tpu7x:2x2x1
jax: 0.10.0
libtpu: 0.0.40
codegen_flags: <defaults>
</compile_context>

<pallas_src>
import functools

import jax
import jax.numpy as jnp
from jax.experimental import pallas as pl
from jax.experimental.pallas import tpu as pltpu

LEAKY_SLOPE = 0.2
FEAT_DIM = 512
ROWS_SMALL = 512            # row budget when grouping several batch elements per step
ROWS_LARGE = 2048           # row budget when tiling a single large point cloud
_STEP_OVERHEAD_ROWS = 256   # ~per-grid-step fixed cost, in row-equivalents (heuristic)


def _round_up(a, m):
    return (a + m - 1) // m * m


def _leaky(h):
    return jnp.where(h > 0, h, LEAKY_SLOPE * h)


def _full_spec(shape):
    # Whole-array block, identical for every grid step (weights / biases).
    return pl.BlockSpec(shape, lambda *_: (0,) * len(shape))


def _mm(a_bf16, w_ref, b_ref):
    # bf16 x bf16 on the MXU, f32 accumulation, f32 bias add.
    return jnp.dot(a_bf16, w_ref[...], preferred_element_type=jnp.float32) + b_ref[...]


# ---------------------------------------------------------------------------
# Fused kernel: point MLP + online max-pool + head MLP epilogue.
#   x_ref   : (BT, NT, cin)            one tile of the point cloud
#   out_ref : (1, BT, packw)           packed fc3|cls output, written at n==last
#   gmax_ref: (BT, FEAT_DIM) scratch   running per-batch max, resident across n
# ---------------------------------------------------------------------------
def _disc_kernel(x_ref, w1, b1, w2, b2, w3, b3, w4, b4,
                 hw1, hb1, hw2, hb2, hw3, hb3,
                 out_ref, gmax_ref, *, bt, nt, cin, n_points, mask_tail):
    n = pl.program_id(1)

    @pl.when(n == 0)
    def _init():
        gmax_ref[...] = jnp.full(gmax_ref.shape, -jnp.inf, gmax_ref.dtype)

    rows = bt * nt
    x = x_ref[...].reshape(rows, cin).astype(jnp.float32)

    # conv1: tiny contraction (cin=3) -> VPU rank-1 FMAs, no MXU pass.
    if cin <= 8:
        h = b1[...] + x[:, 0:1] * w1[0:1, :]
        for c in range(1, cin):
            h = h + x[:, c:c + 1] * w1[c:c + 1, :]
    else:
        h = jnp.dot(x, w1[...], preferred_element_type=jnp.float32) + b1[...]
    h = _leaky(h).astype(jnp.bfloat16)

    # conv2..conv4: bf16 MXU operands, f32 accumulation / bias.
    h = _leaky(_mm(h, w2, b2)).astype(jnp.bfloat16)      # (rows, 64)
    h = _leaky(_mm(h, w3, b3)).astype(jnp.bfloat16)      # (rows, 128)
    h4 = _mm(h, w4, b4)                                  # (rows, 512) f32

    if mask_tail:
        # Last N-tile may be partial: force out-of-range rows to -inf so the
        # max ignores them (padding rows read unspecified data).
        row = jax.lax.broadcasted_iota(jnp.int32, (rows, 1), 0)
        valid = n_points - n * nt
        h4 = jnp.where(row < valid, h4, -jnp.inf)

    if bt == 1:
        tile_max = jnp.max(h4, axis=0, keepdims=True)                 # (1, 512)
    else:
        tile_max = jnp.max(h4.reshape(bt, nt, FEAT_DIM), axis=1)      # (bt, 512)
    gmax_ref[...] = jnp.maximum(gmax_ref[...], tile_max)

    # Head MLP epilogue: once per batch-group, on the completed pooled max.
    @pl.when(n == pl.num_programs(1) - 1)
    def _head():
        g = gmax_ref[...].astype(jnp.bfloat16)                        # (bt, 512)
        f = _leaky(_mm(g, hw1, hb1)).astype(jnp.bfloat16)             # (bt, 128)
        f = _leaky(_mm(f, hw2, hb2)).astype(jnp.bfloat16)             # (bt, 64)
        out_ref[0] = _mm(f, hw3, hb3).astype(out_ref.dtype)           # (bt, packw)


def init_params(key, k=9, input_dim=3, out_dim=1, dtype=jnp.float32):
    """Deterministic synthetic parameters (same shapes as the torch module).

    Weights are stored pre-transposed as (in, out) so layers compute h @ W + b.
    """
    dims = [
        ("conv1", input_dim, 64), ("conv2", 64, 64),
        ("conv3", 64, 128), ("conv4", 128, 512),
        ("fc1", 512, 128), ("fc2", 128, 64),
        ("fc3", 64, out_dim), ("cls", 64, k),
    ]
    params = {}
    for name, cin, cout in dims:
        key, kw, kb = jax.random.split(key, 3)
        scale = 1.0 / jnp.sqrt(jnp.float32(cin))
        params[name + "_w"] = jax.random.normal(kw, (cin, cout), dtype) * scale
        params[name + "_b"] = jax.random.normal(kb, (1, cout), dtype) * scale
    return params


@functools.partial(jax.jit, static_argnames=("k", "out_dim"))
def pointnet_discriminator(x, params, k=9, out_dim=1):
    """x: (B, N, input_dim) -> (x_out: (B, 1, out_dim), cls_out: (B, k))."""
    B, N, cin = x.shape
    out_dtype = x.dtype

    # ---- tiling (no replication padding of x) --------------------------------
    if N <= ROWS_SMALL:
        NT, n_ntiles = N, 1
        bt_cap = max(1, ROWS_SMALL // max(N, 1))
        if B >= 2:
            bt_cap = min(bt_cap, -(-B // 2))   # >=2 parallel blocks for v7x's 2 TCs
        bt_cap = max(1, min(bt_cap, B))
        # BT > 1 merges (BT, N, .) -> (BT*N, .) in-kernel; keep that 8-aligned.
        cands = [bt for bt in range(1, bt_cap + 1) if bt == 1 or N % 8 == 0]
        BT = min(cands,
                 key=lambda bt: ((-(-B // bt)) * (bt * N + _STEP_OVERHEAD_ROWS), -bt))
    else:
        BT = 1
        n_ntiles = -(-N // ROWS_LARGE)
        NT = N if n_ntiles == 1 else _round_up(-(-N // n_ntiles), 8)
    n_btiles = -(-B // BT)
    mask_tail = (n_ntiles * NT != N)

    # ---- weights: bf16 MXU operands, f32 biases, conv1 kept f32 (VPU path) ---
    feat_args = [
        params["conv1_w"].astype(jnp.float32), params["conv1_b"],
        params["conv2_w"].astype(jnp.bfloat16), params["conv2_b"],
        params["conv3_w"].astype(jnp.bfloat16), params["conv3_b"],
        params["conv4_w"].astype(jnp.bfloat16), params["conv4_b"],
    ]
    packw = _round_up(out_dim + k, 128)
    w3h = jnp.pad(jnp.concatenate([params["fc3_w"], params["cls_w"]], axis=1),
                  ((0, 0), (0, packw - out_dim - k))).astype(jnp.bfloat16)
    b3h = jnp.pad(jnp.concatenate([params["fc3_b"], params["cls_b"]], axis=1),
                  ((0, 0), (0, packw - out_dim - k)))
    head_args = [
        params["fc1_w"].astype(jnp.bfloat16), params["fc1_b"],
        params["fc2_w"].astype(jnp.bfloat16), params["fc2_b"],
        w3h, b3h,
    ]
    args = feat_args + head_args

    kern = functools.partial(_disc_kernel, bt=BT, nt=NT, cin=cin,
                             n_points=N, mask_tail=mask_tail)

    head = pl.pallas_call(
        kern,
        out_shape=jax.ShapeDtypeStruct((n_btiles, BT, packw), jnp.float32),
        grid_spec=pltpu.PrefetchScalarGridSpec(
            num_scalar_prefetch=0,
            grid=(n_btiles, n_ntiles),
            in_specs=[pl.BlockSpec((BT, NT, cin), lambda b, n: (b, n, 0))]
                     + [_full_spec(a.shape) for a in args],
            out_specs=pl.BlockSpec((1, BT, packw), lambda b, n: (b, 0, 0)),
            scratch_shapes=[pltpu.VMEM((BT, FEAT_DIM), jnp.float32)],
        ),
        compiler_params=pltpu.CompilerParams(
            dimension_semantics=("parallel", "arbitrary"),
            vmem_limit_bytes=32 * 1024 * 1024),
    )(x, *args)

    flat = head.reshape(n_btiles * BT, packw)[:B]
    x_out = flat[:, :out_dim].reshape(B, 1, out_dim).astype(out_dtype)
    cls_out = flat[:, out_dim:out_dim + k].astype(out_dtype)
    return x_out, cls_out


def _reference(x, params, k, out_dim):
    """Plain-JAX reference mirroring the torch forward (bf16 MXU operands,
    f32 accumulation, f32 conv1 — same numerics as the kernel)."""
    def mmb(a, w, b):
        return jnp.dot(a.astype(jnp.bfloat16), w.astype(jnp.bfloat16),
                       preferred_element_type=jnp.float32) + b
    h = _leaky(jnp.dot(x, params["conv1_w"]) + params["conv1_b"])
    h = _leaky(mmb(h, params["conv2_w"], params["conv2_b"]))
    h = _leaky(mmb(h, params["conv3_w"], params["conv3_b"]))
    h = mmb(h, params["conv4_w"], params["conv4_b"])
    g = jnp.max(h, axis=1, keepdims=True)                      # (B, 1, 512)
    f = _leaky(mmb(g, params["fc1_w"], params["fc1_b"]))
    f = _leaky(mmb(f, params["fc2_w"], params["fc2_b"]))
    o = mmb(f, params["fc3_w"], params["fc3_b"])
    c = mmb(f, params["cls_w"], params["cls_b"])
    return o, c.reshape(x.shape[0], -1)


if __name__ == "__main__":
    key = jax.random.PRNGKey(0)
    k_param, k_x = jax.random.split(key)

    K_CLS, OUT_DIM, INPUT_DIM = 9, 1, 3
    params = init_params(k_param, k=K_CLS, input_dim=INPUT_DIM, out_dim=OUT_DIM)

    # Configs exercise: tiny canonical case, batch-grouped tiles with a partial
    # batch tile, a non-8-aligned N, a single-tile large cloud, and an N-tiled
    # cloud with an in-kernel-masked partial last tile.
    for (B, N) in [(2, 16), (11, 88), (3, 50), (4, 1040), (2, 2504)]:
        k_x, sub = jax.random.split(k_x)
        x = jax.random.normal(sub, (B, N, INPUT_DIM), jnp.float32)

        x_out, cls_out = pointnet_discriminator(x, params, k=K_CLS, out_dim=OUT_DIM)
        jax.block_until_ready((x_out, cls_out))

        x_ref, cls_ref = _reference(x, params, K_CLS, OUT_DIM)
        assert x_out.shape == (B, 1, OUT_DIM) and cls_out.shape == (B, K_CLS)
        assert jnp.allclose(x_out, x_ref, rtol=1e-2, atol=1e-2), (B, N)
        assert jnp.allclose(cls_out, cls_ref, rtol=1e-2, atol=1e-2), (B, N)

    print("KERNEL_OK")
</pallas_src>

<mosaic_0001>
module attributes {stable_mosaic.version = 11 : i64} {
  func.func @_disc_kernel(%arg0: i32, %arg1: i32, %arg2: memref<1x16x3xf32, #tpu.memory_space<vmem>>, %arg3: memref<3x64xf32, #tpu.memory_space<vmem>>, %arg4: memref<1x64xf32, #tpu.memory_space<vmem>>, %arg5: memref<64x64xbf16, #tpu.memory_space<vmem>>, %arg6: memref<1x64xf32, #tpu.memory_space<vmem>>, %arg7: memref<64x128xbf16, #tpu.memory_space<vmem>>, %arg8: memref<1x128xf32, #tpu.memory_space<vmem>>, %arg9: memref<128x512xbf16, #tpu.memory_space<vmem>>, %arg10: memref<1x512xf32, #tpu.memory_space<vmem>>, %arg11: memref<512x128xbf16, #tpu.memory_space<vmem>>, %arg12: memref<1x128xf32, #tpu.memory_space<vmem>>, %arg13: memref<128x64xbf16, #tpu.memory_space<vmem>>, %arg14: memref<1x64xf32, #tpu.memory_space<vmem>>, %arg15: memref<64x128xbf16, #tpu.memory_space<vmem>>, %arg16: memref<1x128xf32, #tpu.memory_space<vmem>>, %arg17: memref<1x1x128xf32, #tpu.memory_space<vmem>>, %arg18: memref<1x512xf32, #tpu.memory_space<vmem>>) attributes {dimension_semantics = [#tpu.dimension_semantics<parallel>, #tpu.dimension_semantics<arbitrary>], iteration_bounds = array<i64: 2, 1>, scalar_prefetch = 0 : i64, scratch_operands = 1 : i64, tpu.core_type = #tpu.core_type<tc>, window_params = [{transform_indices = @transform_0, window_bounds = array<i64: 1, 16, 3>}, {pipeline_mode = #tpu.pipeline_mode<synchronous>, transform_indices = @transform_1, window_bounds = array<i64: 3, 64>}, {pipeline_mode = #tpu.pipeline_mode<synchronous>, transform_indices = @transform_2, window_bounds = array<i64: 1, 64>}, {pipeline_mode = #tpu.pipeline_mode<synchronous>, transform_indices = @transform_3, window_bounds = array<i64: 64, 64>}, {pipeline_mode = #tpu.pipeline_mode<synchronous>, transform_indices = @transform_4, window_bounds = array<i64: 1, 64>}, {pipeline_mode = #tpu.pipeline_mode<synchronous>, transform_indices = @transform_5, window_bounds = array<i64: 64, 128>}, {pipeline_mode = #tpu.pipeline_mode<synchronous>, transform_indices = @transform_6, window_bounds = array<i64: 1, 128>}, {pipeline_mode = #tpu.pipeline_mode<synchronous>, transform_indices = @transform_7, window_bounds = array<i64: 128, 512>}, {pipeline_mode = #tpu.pipeline_mode<synchronous>, transform_indices = @transform_8, window_bounds = array<i64: 1, 512>}, {pipeline_mode = #tpu.pipeline_mode<synchronous>, transform_indices = @transform_9, window_bounds = array<i64: 512, 128>}, {pipeline_mode = #tpu.pipeline_mode<synchronous>, transform_indices = @transform_10, window_bounds = array<i64: 1, 128>}, {pipeline_mode = #tpu.pipeline_mode<synchronous>, transform_indices = @transform_11, window_bounds = array<i64: 128, 64>}, {pipeline_mode = #tpu.pipeline_mode<synchronous>, transform_indices = @transform_12, window_bounds = array<i64: 1, 64>}, {pipeline_mode = #tpu.pipeline_mode<synchronous>, transform_indices = @transform_13, window_bounds = array<i64: 64, 128>}, {pipeline_mode = #tpu.pipeline_mode<synchronous>, transform_indices = @transform_14, window_bounds = array<i64: 1, 128>}, {transform_indices = @transform_15, window_bounds = array<i64: 1, 1, 128>}]} {
    %c0_i32 = arith.constant 0 : i32
    %0 = arith.cmpi eq, %arg1, %c0_i32 : i32
    %1 = arith.extui %0 : i1 to i32
    %c0_i32_0 = arith.constant 0 : i32
    %2 = arith.cmpi ne, %1, %c0_i32_0 : i32
    scf.if %2 {
      %cst_36 = arith.constant 0xFF800000 : f32
      %66 = vector.broadcast %cst_36 : f32 to vector<1x512xf32>
      %c0_37 = arith.constant 0 : index
      %c0_38 = arith.constant 0 : index
      %67 = vector.load %arg18[%c0_37, %c0_38] : memref<1x512xf32, #tpu.memory_space<vmem>>, vector<1x512xf32>
      tpu.vector_store %arg18[%c0_37, %c0_38], %66 {strides = array<i32>} : memref<1x512xf32, #tpu.memory_space<vmem>>, vector<1x512xf32>,
    } else {
    }
    %c0 = arith.constant 0 : index
    %c0_1 = arith.constant 0 : index
    %c0_2 = arith.constant 0 : index
    %3 = vector.load %arg2[%c0, %c0_1, %c0_2] : memref<1x16x3xf32, #tpu.memory_space<vmem>>, vector<1x16x3xf32>
    %4 = vector.shape_cast %3 : vector<1x16x3xf32> to vector<16x3xf32>
    %c0_3 = arith.constant 0 : index
    %c0_4 = arith.constant 0 : index
    %5 = vector.load %arg4[%c0_3, %c0_4] : memref<1x64xf32, #tpu.memory_space<vmem>>, vector<1x64xf32>
    %6 = vector.extract_strided_slice %4 {offsets = [0, 0], sizes = [16, 1], strides = [1, 1]} : vector<16x3xf32> to vector<16x1xf32>
    %c0_5 = arith.constant 0 : index
    %c0_6 = arith.constant 0 : index
    %7 = vector.load %arg3[%c0_5, %c0_6] : memref<3x64xf32, #tpu.memory_space<vmem>>, vector<1x64xf32>
    %8 = vector.broadcast %6 : vector<16x1xf32> to vector<16x64xf32>
    %9 = vector.broadcast %7 : vector<1x64xf32> to vector<16x64xf32>
    %10 = arith.mulf %8, %9 : vector<16x64xf32>
    %11 = vector.broadcast %5 : vector<1x64xf32> to vector<16x64xf32>
    %12 = arith.addf %11, %10 : vector<16x64xf32>
    %13 = vector.extract_strided_slice %4 {offsets = [0, 1], sizes = [16, 1], strides = [1, 1]} : vector<16x3xf32> to vector<16x1xf32>
    %c1 = arith.constant 1 : index
    %c0_7 = arith.constant 0 : index
    %14 = vector.load %arg3[%c1, %c0_7] : memref<3x64xf32, #tpu.memory_space<vmem>>, vector<1x64xf32>
    %15 = vector.broadcast %13 : vector<16x1xf32> to vector<16x64xf32>
    %16 = vector.broadcast %14 : vector<1x64xf32> to vector<16x64xf32>
    %17 = arith.mulf %15, %16 : vector<16x64xf32>
    %18 = arith.addf %12, %17 : vector<16x64xf32>
    %19 = vector.extract_strided_slice %4 {offsets = [0, 2], sizes = [16, 1], strides = [1, 1]} : vector<16x3xf32> to vector<16x1xf32>
    %c2 = arith.constant 2 : index
    %c0_8 = arith.constant 0 : index
    %20 = vector.load %arg3[%c2, %c0_8] : memref<3x64xf32, #tpu.memory_space<vmem>>, vector<1x64xf32>
    %21 = vector.broadcast %19 : vector<16x1xf32> to vector<16x64xf32>
    %22 = vector.broadcast %20 : vector<1x64xf32> to vector<16x64xf32>
    %23 = arith.mulf %21, %22 : vector<16x64xf32>
    %24 = arith.addf %18, %23 : vector<16x64xf32>
    %cst = arith.constant 0.000000e+00 : f32
    %25 = vector.broadcast %cst : f32 to vector<16x64xf32>
    %26 = arith.cmpf ogt, %24, %25 : vector<16x64xf32>
    %cst_9 = arith.constant 2.000000e-01 : f32
    %27 = vector.broadcast %cst_9 : f32 to vector<16x64xf32>
    %28 = arith.mulf %27, %24 : vector<16x64xf32>
    %29 = arith.select %26, %24, %28 : vector<16x64xi1>, vector<16x64xf32>
    %30 = arith.truncf %29 : vector<16x64xf32> to vector<16x64xbf16>
    %c0_10 = arith.constant 0 : index
    %c0_11 = arith.constant 0 : index
    %31 = vector.load %arg5[%c0_10, %c0_11] : memref<64x64xbf16, #tpu.memory_space<vmem>>, vector<64x64xbf16>
    %cst_12 = arith.constant dense<0.000000e+00> : vector<16x64xf32>
    %32 = tpu.matmul %30, %31, %cst_12 {dimension_numbers = #tpu.dot_dimension_numbers<[1], [0], [0], [1], [0, 0, 1, 1], [], []>} : vector<16x64xbf16>, vector<64x64xbf16>, vector<16x64xf32> -> vector<16x64xf32>
    %c0_13 = arith.constant 0 : index
    %c0_14 = arith.constant 0 : index
    %33 = vector.load %arg6[%c0_13, %c0_14] : memref<1x64xf32, #tpu.memory_space<vmem>>, vector<1x64xf32>
    %34 = vector.broadcast %33 : vector<1x64xf32> to vector<16x64xf32>
    %35 = arith.addf %32, %34 : vector<16x64xf32>
    %cst_15 = arith.constant 0.000000e+00 : f32
    %36 = vector.broadcast %cst_15 : f32 to vector<16x64xf32>
    %37 = arith.cmpf ogt, %35, %36 : vector<16x64xf32>
    %cst_16 = arith.constant 2.000000e-01 : f32
    %38 = vector.broadcast %cst_16 : f32 to vector<16x64xf32>
    %39 = arith.mulf %38, %35 : vector<16x64xf32>
    %40 = arith.select %37, %35, %39 : vector<16x64xi1>, vector<16x64xf32>
    %41 = arith.truncf %40 : vector<16x64xf32> to vector<16x64xbf16>
    %c0_17 = arith.constant 0 : index
    %c0_18 = arith.constant 0 : index
    %42 = vector.load %arg7[%c0_17, %c0_18] : memref<64x128xbf16, #tpu.memory_space<vmem>>, vector<64x128xbf16>
    %cst_19 = arith.constant dense<0.000000e+00> : vector<16x128xf32>
    %43 = tpu.matmul %41, %42, %cst_19 {dimension_numbers = #tpu.dot_dimension_numbers<[1], [0], [0], [1], [0, 0, 1, 1], [], []>} : vector<16x64xbf16>, vector<64x128xbf16>, vector<16x128xf32> -> vector<16x128xf32>
    %c0_20 = arith.constant 0 : index
    %c0_21 = arith.constant 0 : index
    %44 = vector.load %arg8[%c0_20, %c0_21] : memref<1x128xf32, #tpu.memory_space<vmem>>, vector<1x128xf32>
    %45 = vector.broadcast %44 : vector<1x128xf32> to vector<16x128xf32>
    %46 = arith.addf %43, %45 : vector<16x128xf32>
    %cst_22 = arith.constant 0.000000e+00 : f32
    %47 = vector.broadcast %cst_22 : f32 to vector<16x128xf32>
    %48 = arith.cmpf ogt, %46, %47 : vector<16x128xf32>
    %cst_23 = arith.constant 2.000000e-01 : f32
    %49 = vector.broadcast %cst_23 : f32 to vector<16x128xf32>
    %50 = arith.mulf %49, %46 : vector<16x128xf32>
    %51 = arith.select %48, %46, %50 : vector<16x128xi1>, vector<16x128xf32>
    %52 = arith.truncf %51 : vector<16x128xf32> to vector<16x128xbf16>
    %c0_24 = arith.constant 0 : index
    %c0_25 = arith.constant 0 : index
    %53 = vector.load %arg9[%c0_24, %c0_25] : memref<128x512xbf16, #tpu.memory_space<vmem>>, vector<128x512xbf16>
    %cst_26 = arith.constant dense<0.000000e+00> : vector<16x512xf32>
    %54 = tpu.matmul %52, %53, %cst_26 {dimension_numbers = #tpu.dot_dimension_numbers<[1], [0], [0], [1], [0, 0, 1, 1], [], []>} : vector<16x128xbf16>, vector<128x512xbf16>, vector<16x512xf32> -> vector<16x512xf32>
    %c0_27 = arith.constant 0 : index
    %c0_28 = arith.constant 0 : index
    %55 = vector.load %arg10[%c0_27, %c0_28] : memref<1x512xf32, #tpu.memory_space<vmem>>, vector<1x512xf32>
    %56 = vector.broadcast %55 : vector<1x512xf32> to vector<16x512xf32>
    %57 = arith.addf %54, %56 : vector<16x512xf32>
    %cst_29 = arith.constant dense<0xFF800000> : vector<512xf32>
    %58 = vector.multi_reduction <maximumf>, %57, %cst_29 [0] : vector<16x512xf32> to vector<512xf32>
    %59 = vector.shape_cast %58 : vector<512xf32> to vector<1x512xf32>
    %c0_30 = arith.constant 0 : index
    %c0_31 = arith.constant 0 : index
    %60 = vector.load %arg18[%c0_30, %c0_31] : memref<1x512xf32, #tpu.memory_space<vmem>>, vector<1x512xf32>
    %61 = arith.maximumf %60, %59 : vector<1x512xf32>
    %c0_32 = arith.constant 0 : index
    %c0_33 = arith.constant 0 : index
    %62 = vector.load %arg18[%c0_32, %c0_33] : memref<1x512xf32, #tpu.memory_space<vmem>>, vector<1x512xf32>
    tpu.vector_store %arg18[%c0_32, %c0_33], %61 {strides = array<i32>} : memref<1x512xf32, #tpu.memory_space<vmem>>, vector<1x512xf32>,
    %c0_i32_34 = arith.constant 0 : i32
    %63 = arith.cmpi eq, %arg1, %c0_i32_34 : i32
    %64 = arith.extui %63 : i1 to i32
    %c0_i32_35 = arith.constant 0 : i32
    %65 = arith.cmpi ne, %64, %c0_i32_35 : i32
    scf.if %65 {
      %c0_36 = arith.constant 0 : index
      %c0_37 = arith.constant 0 : index
      %66 = vector.load %arg18[%c0_36, %c0_37] : memref<1x512xf32, #tpu.memory_space<vmem>>, vector<1x512xf32>
      %67 = arith.truncf %66 : vector<1x512xf32> to vector<1x512xbf16>
      %c0_38 = arith.constant 0 : index
      %c0_39 = arith.constant 0 : index
      %68 = vector.load %arg11[%c0_38, %c0_39] : memref<512x128xbf16, #tpu.memory_space<vmem>>, vector<512x128xbf16>
      %cst_40 = arith.constant dense<0.000000e+00> : vector<1x128xf32>
      %69 = tpu.matmul %67, %68, %cst_40 {dimension_numbers = #tpu.dot_dimension_numbers<[1], [0], [0], [1], [0, 0, 1, 1], [], []>} : vector<1x512xbf16>, vector<512x128xbf16>, vector<1x128xf32> -> vector<1x128xf32>
      %c0_41 = arith.constant 0 : index
      %c0_42 = arith.constant 0 : index
      %70 = vector.load %arg12[%c0_41, %c0_42] : memref<1x128xf32, #tpu.memory_space<vmem>>, vector<1x128xf32>
      %71 = arith.addf %69, %70 : vector<1x128xf32>
      %cst_43 = arith.constant 0.000000e+00 : f32
      %72 = vector.broadcast %cst_43 : f32 to vector<1x128xf32>
      %73 = arith.cmpf ogt, %71, %72 : vector<1x128xf32>
      %cst_44 = arith.constant 2.000000e-01 : f32
      %74 = vector.broadcast %cst_44 : f32 to vector<1x128xf32>
      %75 = arith.mulf %74, %71 : vector<1x128xf32>
      %76 = arith.select %73, %71, %75 : vector<1x128xi1>, vector<1x128xf32>
      %77 = arith.truncf %76 : vector<1x128xf32> to vector<1x128xbf16>
      %c0_45 = arith.constant 0 : index
      %c0_46 = arith.constant 0 : index
      %78 = vector.load %arg13[%c0_45, %c0_46] : memref<128x64xbf16, #tpu.memory_space<vmem>>, vector<128x64xbf16>
      %cst_47 = arith.constant dense<0.000000e+00> : vector<1x64xf32>
      %79 = tpu.matmul %77, %78, %cst_47 {dimension_numbers = #tpu.dot_dimension_numbers<[1], [0], [0], [1], [0, 0, 1, 1], [], []>} : vector<1x128xbf16>, vector<128x64xbf16>, vector<1x64xf32> -> vector<1x64xf32>
      %c0_48 = arith.constant 0 : index
      %c0_49 = arith.constant 0 : index
      %80 = vector.load %arg14[%c0_48, %c0_49] : memref<1x64xf32, #tpu.memory_space<vmem>>, vector<1x64xf32>
      %81 = arith.addf %79, %80 : vector<1x64xf32>
      %cst_50 = arith.constant 0.000000e+00 : f32
      %82 = vector.broadcast %cst_50 : f32 to vector<1x64xf32>
      %83 = arith.cmpf ogt, %81, %82 : vector<1x64xf32>
      %cst_51 = arith.constant 2.000000e-01 : f32
      %84 = vector.broadcast %cst_51 : f32 to vector<1x64xf32>
      %85 = arith.mulf %84, %81 : vector<1x64xf32>
      %86 = arith.select %83, %81, %85 : vector<1x64xi1>, vector<1x64xf32>
      %87 = arith.truncf %86 : vector<1x64xf32> to vector<1x64xbf16>
      %c0_52 = arith.constant 0 : index
      %c0_53 = arith.constant 0 : index
      %88 = vector.load %arg15[%c0_52, %c0_53] : memref<64x128xbf16, #tpu.memory_space<vmem>>, vector<64x128xbf16>
      %cst_54 = arith.constant dense<0.000000e+00> : vector<1x128xf32>
      %89 = tpu.matmul %87, %88, %cst_54 {dimension_numbers = #tpu.dot_dimension_numbers<[1], [0], [0], [1], [0, 0, 1, 1], [], []>} : vector<1x64xbf16>, vector<64x128xbf16>, vector<1x128xf32> -> vector<1x128xf32>
      %c0_55 = arith.constant 0 : index
      %c0_56 = arith.constant 0 : index
      %90 = vector.load %arg16[%c0_55, %c0_56] : memref<1x128xf32, #tpu.memory_space<vmem>>, vector<1x128xf32>
      %91 = arith.addf %89, %90 : vector<1x128xf32>
      %c0_57 = arith.constant 0 : index
      %c0_58 = arith.constant 0 : index
      %c0_59 = arith.constant 0 : index
      %92 = vector.load %arg17[%c0_57, %c0_58, %c0_59] : memref<1x1x128xf32, #tpu.memory_space<vmem>>, vector<1x1x128xf32>
      %93 = vector.shape_cast %92 : vector<1x1x128xf32> to vector<1x128xf32>
      %94 = vector.shape_cast %91 : vector<1x128xf32> to vector<1x1x128xf32>
      tpu.vector_store %arg17[%c0_57, %c0_58, %c0_59], %94 {strides = array<i32>} : memref<1x1x128xf32, #tpu.memory_space<vmem>>, vector<1x1x128xf32>,
    } else {
    }
    return
  }
  func.func @transform_0(%arg0: i32, %arg1: i32) -> (i32, i32, i32) {
    %c0_i32 = arith.constant 0 : i32
    %c0_i32_0 = arith.constant 0 : i32
    return %arg0, %arg1, %c0_i32 : i32, i32, i32
  }
  func.func @transform_1(%arg0: i32, %arg1: i32) -> (i32, i32) {
    %c0_i32 = arith.constant 0 : i32
    %c0_i32_0 = arith.constant 0 : i32
    %c0_i32_1 = arith.constant 0 : i32
    return %c0_i32, %c0_i32_0 : i32, i32
  }
  func.func @transform_2(%arg0: i32, %arg1: i32) -> (i32, i32) {
    %c0_i32 = arith.constant 0 : i32
    %c0_i32_0 = arith.constant 0 : i32
    %c0_i32_1 = arith.constant 0 : i32
    return %c0_i32, %c0_i32_0 : i32, i32
  }
  func.func @transform_3(%arg0: i32, %arg1: i32) -> (i32, i32) {
    %c0_i32 = arith.constant 0 : i32
    %c0_i32_0 = arith.constant 0 : i32
    %c0_i32_1 = arith.constant 0 : i32
    return %c0_i32, %c0_i32_0 : i32, i32
  }
  func.func @transform_4(%arg0: i32, %arg1: i32) -> (i32, i32) {
    %c0_i32 = arith.constant 0 : i32
    %c0_i32_0 = arith.constant 0 : i32
    %c0_i32_1 = arith.constant 0 : i32
    return %c0_i32, %c0_i32_0 : i32, i32
  }
  func.func @transform_5(%arg0: i32, %arg1: i32) -> (i32, i32) {
    %c0_i32 = arith.constant 0 : i32
    %c0_i32_0 = arith.constant 0 : i32
    %c0_i32_1 = arith.constant 0 : i32
    return %c0_i32, %c0_i32_0 : i32, i32
  }
  func.func @transform_6(%arg0: i32, %arg1: i32) -> (i32, i32) {
    %c0_i32 = arith.constant 0 : i32
    %c0_i32_0 = arith.constant 0 : i32
    %c0_i32_1 = arith.constant 0 : i32
    return %c0_i32, %c0_i32_0 : i32, i32
  }
  func.func @transform_7(%arg0: i32, %arg1: i32) -> (i32, i32) {
    %c0_i32 = arith.constant 0 : i32
    %c0_i32_0 = arith.constant 0 : i32
    %c0_i32_1 = arith.constant 0 : i32
    return %c0_i32, %c0_i32_0 : i32, i32
  }
  func.func @transform_8(%arg0: i32, %arg1: i32) -> (i32, i32) {
    %c0_i32 = arith.constant 0 : i32
    %c0_i32_0 = arith.constant 0 : i32
    %c0_i32_1 = arith.constant 0 : i32
    return %c0_i32, %c0_i32_0 : i32, i32
  }
  func.func @transform_9(%arg0: i32, %arg1: i32) -> (i32, i32) {
    %c0_i32 = arith.constant 0 : i32
    %c0_i32_0 = arith.constant 0 : i32
    %c0_i32_1 = arith.constant 0 : i32
    return %c0_i32, %c0_i32_0 : i32, i32
  }
  func.func @transform_10(%arg0: i32, %arg1: i32) -> (i32, i32) {
    %c0_i32 = arith.constant 0 : i32
    %c0_i32_0 = arith.constant 0 : i32
    %c0_i32_1 = arith.constant 0 : i32
    return %c0_i32, %c0_i32_0 : i32, i32
  }
  func.func @transform_11(%arg0: i32, %arg1: i32) -> (i32, i32) {
    %c0_i32 = arith.constant 0 : i32
    %c0_i32_0 = arith.constant 0 : i32
    %c0_i32_1 = arith.constant 0 : i32
    return %c0_i32, %c0_i32_0 : i32, i32
  }
  func.func @transform_12(%arg0: i32, %arg1: i32) -> (i32, i32) {
    %c0_i32 = arith.constant 0 : i32
    %c0_i32_0 = arith.constant 0 : i32
    %c0_i32_1 = arith.constant 0 : i32
    return %c0_i32, %c0_i32_0 : i32, i32
  }
  func.func @transform_13(%arg0: i32, %arg1: i32) -> (i32, i32) {
    %c0_i32 = arith.constant 0 : i32
    %c0_i32_0 = arith.constant 0 : i32
    %c0_i32_1 = arith.constant 0 : i32
    return %c0_i32, %c0_i32_0 : i32, i32
  }
  func.func @transform_14(%arg0: i32, %arg1: i32) -> (i32, i32) {
    %c0_i32 = arith.constant 0 : i32
    %c0_i32_0 = arith.constant 0 : i32
    %c0_i32_1 = arith.constant 0 : i32
    return %c0_i32, %c0_i32_0 : i32, i32
  }
  func.func @transform_15(%arg0: i32, %arg1: i32) -> (i32, i32, i32) {
    %c0_i32 = arith.constant 0 : i32
    %c0_i32_0 = arith.constant 0 : i32
    %c0_i32_1 = arith.constant 0 : i32
    return %arg0, %c0_i32, %c0_i32_0 : i32, i32, i32
  }
}

</mosaic_0001>

<llo_original>
// kernel: pointnet_discriminator.1
$region0: #{pointnet_discriminator.1}
  #allocation0 [shape = 'u32[]', space=smem, size = 0x4, offset = 0x4, fixed_abs, tag = 'smem constant byte address 0x4 - core index']
  #allocation1 [shape = 'u32[144,128]{1,0:T(1,128)}', space=vmem, size = 0x12000, scoped, tag = 'internal scratch']
  #allocation2 [shape = 'f32[1,512]{1,0:T(1,128)}', space=vmem, size = 0x800, scoped, tag = 'scratch operand']
  %s0 = inlined_call_operand.vmem [shape: f32[2,16,3], index: 0, kind: input, shape index: {}]
  %s1 = inlined_call_operand.vmem [shape: f32[3,64], index: 1, kind: input, shape index: {}]
  %s2 = inlined_call_operand.vmem [shape: f32[1,64], index: 2, kind: input, shape index: {}]
  %s3 = inlined_call_operand.vmem [shape: bf16[64,64], index: 3, kind: input, shape index: {}]
  %s4 = inlined_call_operand.vmem [shape: f32[1,64], index: 4, kind: input, shape index: {}]
  %s5 = inlined_call_operand.vmem [shape: bf16[64,128], index: 5, kind: input, shape index: {}]
  %s6 = inlined_call_operand.vmem [shape: f32[1,128], index: 6, kind: input, shape index: {}]
  %s7 = inlined_call_operand.vmem [shape: bf16[128,512], index: 7, kind: input, shape index: {}]
  %s8 = inlined_call_operand.vmem [shape: f32[1,512], index: 8, kind: input, shape index: {}]
  %s9 = inlined_call_operand.vmem [shape: bf16[512,128], index: 9, kind: input, shape index: {}]
  %s10 = inlined_call_operand.vmem [shape: f32[1,128], index: 10, kind: input, shape index: {}]
  %s11 = inlined_call_operand.vmem [shape: bf16[128,64], index: 11, kind: input, shape index: {}]
  %s12 = inlined_call_operand.vmem [shape: f32[1,64], index: 12, kind: input, shape index: {}]
  %s13 = inlined_call_operand.vmem [shape: bf16[64,128], index: 13, kind: input, shape index: {}]
  %s14 = inlined_call_operand.vmem [shape: f32[1,128], index: 14, kind: input, shape index: {}]
  %s15 = inlined_call_operand.vmem [shape: f32[2,1,128], index: 15, kind: output, shape index: {}]
  %s16 = sld [smem:[#allocation0]]
  $region101: #{pointnet_discriminator.1} parent=0
    _
  %s18 = ssub.s32 1, %s16
  %s19 = scalar_select 0, %s18, %s16
  loop: start=0, step=1, limit=4
  $region2: #{pointnet_discriminator.1} parent=0 // loop_pre_header
    _
  $region3: #{pointnet_discriminator.1} parent=0 // loop_header
    %s21 = sphi 0, %s25
    %p22 = scmp.ge.s32.totalorder %s21, 4
    %s28 = sphi 0, %s40
    %s29 = sphi 0, %s36
    %s30 = sphi 0, %s28
    %s31 = sphi 0, %s29
    %s32 = sphi 0, %s30
    %s33 = sphi 0, %s31
    %s45 = sphi 0, %s47
    %s48 = sphi 0, %s45
    %s49 = sphi 0, %s48
    %s65 = sphi 0, %s49
    %s69 = sphi 0, %s69
    %s71 = sphi 0, %s69
    %s72 = sphi 0, %s71
    %s86 = sphi 0, %s72
    %s90 = sphi 0, %s90
    %s92 = sphi 0, %s90
    %s93 = sphi 0, %s92
    %s107 = sphi 0, %s93
    %s111 = sphi 0, %s111
    %s113 = sphi 0, %s111
    %s114 = sphi 0, %s113
    %s128 = sphi 0, %s114
    %s132 = sphi 0, %s132
    %s134 = sphi 0, %s132
    %s135 = sphi 0, %s134
    %s149 = sphi 0, %s135
    %s153 = sphi 0, %s153
    %s155 = sphi 0, %s153
    %s156 = sphi 0, %s155
    %s170 = sphi 0, %s156
    %s174 = sphi 0, %s174
    %s176 = sphi 0, %s174
    %s177 = sphi 0, %s176
    %s191 = sphi 0, %s177
    %s195 = sphi 0, %s195
    %s197 = sphi 0, %s195
    %s198 = sphi 0, %s197
    %s212 = sphi 0, %s198
    %s216 = sphi 0, %s216
    %s218 = sphi 0, %s216
    %s219 = sphi 0, %s218
    %s233 = sphi 0, %s219
    %s237 = sphi 0, %s237
    %s239 = sphi 0, %s237
    %s240 = sphi 0, %s239
    %s254 = sphi 0, %s240
    %s258 = sphi 0, %s258
    %s260 = sphi 0, %s258
    %s261 = sphi 0, %s260
    %s275 = sphi 0, %s261
    %s279 = sphi 0, %s279
    %s281 = sphi 0, %s279
    %s282 = sphi 0, %s281
    %s296 = sphi 0, %s282
    %s300 = sphi 0, %s300
    %s302 = sphi 0, %s300
    %s303 = sphi 0, %s302
    %s317 = sphi 0, %s303
    %s321 = sphi 0, %s321
    %s323 = sphi 0, %s321
    %s324 = sphi 0, %s323
    %s338 = sphi 0, %s324
    %s342 = sphi 0, %s342
    %s344 = sphi 0, %s342
    %s345 = sphi 0, %s344
    %s359 = sphi 0, %s345
    %s365 = sphi 0, %s367
    %s368 = sphi 0, %s365
    %s369 = sphi 0, %s368
    %s385 = sphi 0, %s369
  $region4: #{pointnet_discriminator.1} parent=0 // loop_header_branch
    %24 = sbr.rel (%p22) target = $region8
  $region5: #{pointnet_discriminator.1} parent=0 // loop_body
    %s26 = ssub.s32 %s21, 1
    %s27 = ssub.s32 %s21, 2
    %s34 = sadd.s32 1, %s29
    %p35 = scmp.ge.s32.totalorder %s34, 1
    %s36 = scalar_select %p35, 0, %s34
    %s37 = sadd.s32 1, %s28
    %s38 = scalar_select %p35, %s37, %s28
    %p39 = scmp.ge.s32.totalorder %s38, 2
    %s40 = scalar_select %p39, 0, %s38
    %s41 = ssub.s32 %s28, %s40
    %s42 = ssub.s32 %s29, %s36
    %s43 = sor.u32 %s41, %s42
    %p44 = scmp.eq.s32.totalorder %s43, 0
    %s46 = sadd.s32 %s45, 1
    %s47 = scalar_select %p44, %s45, %s46
    %p50 = pneg %p44
    %p51 = scmp.eq.s32.totalorder %s21, 1
    %p52 = por %p50, %p51
    %p53 = scmp.ne.s32.totalorder %s45, %s48
    %p54 = scmp.eq.s32.totalorder %s21, 0
    %p55 = por %p53, %p54
    %p56 = scmp.ne.s32.totalorder %s45, %s48
    %p57 = scmp.eq.s32.totalorder %s26, 1
    %p58 = por %p56, %p57
    %p59 = scmp.ne.s32.totalorder %s48, %s49
    %p60 = scmp.eq.s32.totalorder %s26, 0
    %p61 = por %p59, %p60
    %p62 = scmp.ne.s32.totalorder %s48, %s49
    %p63 = scmp.eq.s32.totalorder %s27, 1
    %p64 = por %p62, %p63
    %p66 = scmp.ne.s32.totalorder %s49, %s65
    %p67 = scmp.eq.s32.totalorder %s27, 0
    %p68 = por %p66, %p67
    %s70 = sadd.s32 %s69, 1
    %p73 = scmp.eq.s32.totalorder %s21, 1
    %p74 = scmp.ne.s32.totalorder %s69, %s71
    %p75 = scmp.eq.s32.totalorder %s21, 0
    %p76 = por %p74, %p75
    %p77 = scmp.ne.s32.totalorder %s69, %s71
    %p78 = scmp.eq.s32.totalorder %s26, 1
    %p79 = por %p77, %p78
    %p80 = scmp.ne.s32.totalorder %s71, %s72
    %p81 = scmp.eq.s32.totalorder %s26, 0
    %p82 = por %p80, %p81
    %p83 = scmp.ne.s32.totalorder %s71, %s72
    %p84 = scmp.eq.s32.totalorder %s27, 1
    %p85 = por %p83, %p84
    %p87 = scmp.ne.s32.totalorder %s72, %s86
    %p88 = scmp.eq.s32.totalorder %s27, 0
    %p89 = por %p87, %p88
    %s91 = sadd.s32 %s90, 1
    %p94 = scmp.eq.s32.totalorder %s21, 1
    %p95 = scmp.ne.s32.totalorder %s90, %s92
    %p96 = scmp.eq.s32.totalorder %s21, 0
    %p97 = por %p95, %p96
    %p98 = scmp.ne.s32.totalorder %s90, %s92
    %p99 = scmp.eq.s32.totalorder %s26, 1
    %p100 = por %p98, %p99
    %p101 = scmp.ne.s32.totalorder %s92, %s93
    %p102 = scmp.eq.s32.totalorder %s26, 0
    %p103 = por %p101, %p102
    %p104 = scmp.ne.s32.totalorder %s92, %s93
    %p105 = scmp.eq.s32.totalorder %s27, 1
    %p106 = por %p104, %p105
    %p108 = scmp.ne.s32.totalorder %s93, %s107
    %p109 = scmp.eq.s32.totalorder %s27, 0
    %p110 = por %p108, %p109
    %s112 = sadd.s32 %s111, 1
    %p115 = scmp.eq.s32.totalorder %s21, 1
    %p116 = scmp.ne.s32.totalorder %s111, %s113
    %p117 = scmp.eq.s32.totalorder %s21, 0
    %p118 = por %p116, %p117
    %p119 = scmp.ne.s32.totalorder %s111, %s113
    %p120 = scmp.eq.s32.totalorder %s26, 1
    %p121 = por %p119, %p120
    %p122 = scmp.ne.s32.totalorder %s113, %s114
    %p123 = scmp.eq.s32.totalorder %s26, 0
    %p124 = por %p122, %p123
    %p125 = scmp.ne.s32.totalorder %s113, %s114
    %p126 = scmp.eq.s32.totalorder %s27, 1
    %p127 = por %p125, %p126
    %p129 = scmp.ne.s32.totalorder %s114, %s128
    %p130 = scmp.eq.s32.totalorder %s27, 0
    %p131 = por %p129, %p130
    %s133 = sadd.s32 %s132, 1
    %p136 = scmp.eq.s32.totalorder %s21, 1
    %p137 = scmp.ne.s32.totalorder %s132, %s134
    %p138 = scmp.eq.s32.totalorder %s21, 0
    %p139 = por %p137, %p138
    %p140 = scmp.ne.s32.totalorder %s132, %s134
    %p141 = scmp.eq.s32.totalorder %s26, 1
    %p142 = por %p140, %p141
    %p143 = scmp.ne.s32.totalorder %s134, %s135
    %p144 = scmp.eq.s32.totalorder %s26, 0
    %p145 = por %p143, %p144
    %p146 = scmp.ne.s32.totalorder %s134, %s135
    %p147 = scmp.eq.s32.totalorder %s27, 1
    %p148 = por %p146, %p147
    %p150 = scmp.ne.s32.totalorder %s135, %s149
    %p151 = scmp.eq.s32.totalorder %s27, 0
    %p152 = por %p150, %p151
    %s154 = sadd.s32 %s153, 1
    %p157 = scmp.eq.s32.totalorder %s21, 1
    %p158 = scmp.ne.s32.totalorder %s153, %s155
    %p159 = scmp.eq.s32.totalorder %s21, 0
    %p160 = por %p158, %p159
    %p161 = scmp.ne.s32.totalorder %s153, %s155
    %p162 = scmp.eq.s32.totalorder %s26, 1
    %p163 = por %p161, %p162
    %p164 = scmp.ne.s32.totalorder %s155, %s156
    %p165 = scmp.eq.s32.totalorder %s26, 0
    %p166 = por %p164, %p165
    %p167 = scmp.ne.s32.totalorder %s155, %s156
    %p168 = scmp.eq.s32.totalorder %s27, 1
    %p169 = por %p167, %p168
    %p171 = scmp.ne.s32.totalorder %s156, %s170
    %p172 = scmp.eq.s32.totalorder %s27, 0
    %p173 = por %p171, %p172
    %s175 = sadd.s32 %s174, 1
    %p178 = scmp.eq.s32.totalorder %s21, 1
    %p179 = scmp.ne.s32.totalorder %s174, %s176
    %p180 = scmp.eq.s32.totalorder %s21, 0
    %p181 = por %p179, %p180
    %p182 = scmp.ne.s32.totalorder %s174, %s176
    %p183 = scmp.eq.s32.totalorder %s26, 1
    %p184 = por %p182, %p183
    %p185 = scmp.ne.s32.totalorder %s176, %s177
    %p186 = scmp.eq.s32.totalorder %s26, 0
    %p187 = por %p185, %p186
    %p188 = scmp.ne.s32.totalorder %s176, %s177
    %p189 = scmp.eq.s32.totalorder %s27, 1
    %p190 = por %p188, %p189
    %p192 = scmp.ne.s32.totalorder %s177, %s191
    %p193 = scmp.eq.s32.totalorder %s27, 0
    %p194 = por %p192, %p193
    %s196 = sadd.s32 %s195, 1
    %p199 = scmp.eq.s32.totalorder %s21, 1
    %p200 = scmp.ne.s32.totalorder %s195, %s197
    %p201 = scmp.eq.s32.totalorder %s21, 0
    %p202 = por %p200, %p201
    %p203 = scmp.ne.s32.totalorder %s195, %s197
    %p204 = scmp.eq.s32.totalorder %s26, 1
    %p205 = por %p203, %p204
    %p206 = scmp.ne.s32.totalorder %s197, %s198
    %p207 = scmp.eq.s32.totalorder %s26, 0
    %p208 = por %p206, %p207
    %p209 = scmp.ne.s32.totalorder %s197, %s198
    %p210 = scmp.eq.s32.totalorder %s27, 1
    %p211 = por %p209, %p210
    %p213 = scmp.ne.s32.totalorder %s198, %s212
    %p214 = scmp.eq.s32.totalorder %s27, 0
    %p215 = por %p213, %p214
    %s217 = sadd.s32 %s216, 1
    %p220 = scmp.eq.s32.totalorder %s21, 1
    %p221 = scmp.ne.s32.totalorder %s216, %s218
    %p222 = scmp.eq.s32.totalorder %s21, 0
    %p223 = por %p221, %p222
    %p224 = scmp.ne.s32.totalorder %s216, %s218
    %p225 = scmp.eq.s32.totalorder %s26, 1
    %p226 = por %p224, %p225
    %p227 = scmp.ne.s32.totalorder %s218, %s219
    %p228 = scmp.eq.s32.totalorder %s26, 0
    %p229 = por %p227, %p228
    %p230 = scmp.ne.s32.totalorder %s218, %s219
    %p231 = scmp.eq.s32.totalorder %s27, 1
    %p232 = por %p230, %p231
    %p234 = scmp.ne.s32.totalorder %s219, %s233
    %p235 = scmp.eq.s32.totalorder %s27, 0
    %p236 = por %p234, %p235
    %s238 = sadd.s32 %s237, 1
    %p241 = scmp.eq.s32.totalorder %s21, 1
    %p242 = scmp.ne.s32.totalorder %s237, %s239
    %p243 = scmp.eq.s32.totalorder %s21, 0
    %p244 = por %p242, %p243
    %p245 = scmp.ne.s32.totalorder %s237, %s239
    %p246 = scmp.eq.s32.totalorder %s26, 1
    %p247 = por %p245, %p246
    %p248 = scmp.ne.s32.totalorder %s239, %s240
    %p249 = scmp.eq.s32.totalorder %s26, 0
    %p250 = por %p248, %p249
    %p251 = scmp.ne.s32.totalorder %s239, %s240
    %p252 = scmp.eq.s32.totalorder %s27, 1
    %p253 = por %p251, %p252
    %p255 = scmp.ne.s32.totalorder %s240, %s254
    %p256 = scmp.eq.s32.totalorder %s27, 0
    %p257 = por %p255, %p256
    %s259 = sadd.s32 %s258, 1
    %p262 = scmp.eq.s32.totalorder %s21, 1
    %p263 = scmp.ne.s32.totalorder %s258, %s260
    %p264 = scmp.eq.s32.totalorder %s21, 0
    %p265 = por %p263, %p264
    %p266 = scmp.ne.s32.totalorder %s258, %s260
    %p267 = scmp.eq.s32.totalorder %s26, 1
    %p268 = por %p266, %p267
    %p269 = scmp.ne.s32.totalorder %s260, %s261
    %p270 = scmp.eq.s32.totalorder %s26, 0
    %p271 = por %p269, %p270
    %p272 = scmp.ne.s32.totalorder %s260, %s261
    %p273 = scmp.eq.s32.totalorder %s27, 1
    %p274 = por %p272, %p273
    %p276 = scmp.ne.s32.totalorder %s261, %s275
    %p277 = scmp.eq.s32.totalorder %s27, 0
    %p278 = por %p276, %p277
    %s280 = sadd.s32 %s279, 1
    %p283 = scmp.eq.s32.totalorder %s21, 1
    %p284 = scmp.ne.s32.totalorder %s279, %s281
    %p285 = scmp.eq.s32.totalorder %s21, 0
    %p286 = por %p284, %p285
    %p287 = scmp.ne.s32.totalorder %s279, %s281
    %p288 = scmp.eq.s32.totalorder %s26, 1
    %p289 = por %p287, %p288
    %p290 = scmp.ne.s32.totalorder %s281, %s282
    %p291 = scmp.eq.s32.totalorder %s26, 0
    %p292 = por %p290, %p291
    %p293 = scmp.ne.s32.totalorder %s281, %s282
    %p294 = scmp.eq.s32.totalorder %s27, 1
    %p295 = por %p293, %p294
    %p297 = scmp.ne.s32.totalorder %s282, %s296
    %p298 = scmp.eq.s32.totalorder %s27, 0
    %p299 = por %p297, %p298
    %s301 = sadd.s32 %s300, 1
    %p304 = scmp.eq.s32.totalorder %s21, 1
    %p305 = scmp.ne.s32.totalorder %s300, %s302
    %p306 = scmp.eq.s32.totalorder %s21, 0
    %p307 = por %p305, %p306
    %p308 = scmp.ne.s32.totalorder %s300, %s302
    %p309 = scmp.eq.s32.totalorder %s26, 1
    %p310 = por %p308, %p309
    %p311 = scmp.ne.s32.totalorder %s302, %s303
    %p312 = scmp.eq.s32.totalorder %s26, 0
    %p313 = por %p311, %p312
    %p314 = scmp.ne.s32.totalorder %s302, %s303
    %p315 = scmp.eq.s32.totalorder %s27, 1
    %p316 = por %p314, %p315
    %p318 = scmp.ne.s32.totalorder %s303, %s317
    %p319 = scmp.eq.s32.totalorder %s27, 0
    %p320 = por %p318, %p319
    %s322 = sadd.s32 %s321, 1
    %p325 = scmp.eq.s32.totalorder %s21, 1
    %p326 = scmp.ne.s32.totalorder %s321, %s323
    %p327 = scmp.eq.s32.totalorder %s21, 0
    %p328 = por %p326, %p327
    %p329 = scmp.ne.s32.totalorder %s321, %s323
    %p330 = scmp.eq.s32.totalorder %s26, 1
    %p331 = por %p329, %p330
    %p332 = scmp.ne.s32.totalorder %s323, %s324
    %p333 = scmp.eq.s32.totalorder %s26, 0
    %p334 = por %p332, %p333
    %p335 = scmp.ne.s32.totalorder %s323, %s324
    %p336 = scmp.eq.s32.totalorder %s27, 1
    %p337 = por %p335, %p336
    %p339 = scmp.ne.s32.totalorder %s324, %s338
    %p340 = scmp.eq.s32.totalorder %s27, 0
    %p341 = por %p339, %p340
    %s343 = sadd.s32 %s342, 1
    %p346 = scmp.eq.s32.totalorder %s21, 1
    %p347 = scmp.ne.s32.totalorder %s342, %s344
    %p348 = scmp.eq.s32.totalorder %s21, 0
    %p349 = por %p347, %p348
    %p350 = scmp.ne.s32.totalorder %s342, %s344
    %p351 = scmp.eq.s32.totalorder %s26, 1
    %p352 = por %p350, %p351
    %p353 = scmp.ne.s32.totalorder %s344, %s345
    %p354 = scmp.eq.s32.totalorder %s26, 0
    %p355 = por %p353, %p354
    %p356 = scmp.ne.s32.totalorder %s344, %s345
    %p357 = scmp.eq.s32.totalorder %s27, 1
    %p358 = por %p356, %p357
    %p360 = scmp.ne.s32.totalorder %s345, %s359
    %p361 = scmp.eq.s32.totalorder %s27, 0
    %p362 = por %p360, %p361
    %s363 = ssub.s32 %s28, %s40
    %p364 = scmp.eq.s32.totalorder %s363, 0
    %s366 = sadd.s32 %s365, 1
    %s367 = scalar_select %p364, %s365, %s366
    %p370 = pneg %p364
    %p371 = scmp.eq.s32.totalorder %s21, 1
    %p372 = por %p370, %p371
    %p373 = scmp.ne.s32.totalorder %s365, %s368
    %p374 = scmp.eq.s32.totalorder %s21, 0
    %p375 = por %p373, %p374
    %p376 = scmp.ne.s32.totalorder %s365, %s368
    %p377 = scmp.eq.s32.totalorder %s26, 1
    %p378 = por %p376, %p377
    %p379 = scmp.ne.s32.totalorder %s368, %s369
    %p380 = scmp.eq.s32.totalorder %s26, 0
    %p381 = por %p379, %p380
    %p382 = scmp.ne.s32.totalorder %s368, %s369
    %p383 = scmp.eq.s32.totalorder %s27, 1
    %p384 = por %p382, %p383
    %p386 = scmp.ne.s32.totalorder %s369, %s385
    %p387 = scmp.eq.s32.totalorder %s27, 0
    %p388 = por %p386, %p387
    %p389 = scmp.le.s32.totalorder 1, %s21
    %p390 = scmp.lt.s32.totalorder %s21, 3
    %p391 = pnand %p389, %p390
    %p392 = pneg %p391
    // Predicated region
    $region9: #{pointnet_discriminator.1} parent=5 // pred_check
      _
    $region10: #{pointnet_discriminator.1} parent=5 // pred_check_branch
      %394 = sbr.rel (%p391) target = $region12
    $region11: #{pointnet_discriminator.1} parent=5 // pred_region
      %s395 = ssub.s32 %s21, 1
      // Predicated region
      $region13: #{pointnet_discriminator.1} parent=11 // pred_check
        %p396 = pneg %p82
      $region14: #{pointnet_discriminator.1} parent=11 // pred_check_branch
        %398 = sbr.rel (%p396) target = $region16
      $region15: #{pointnet_discriminator.1} parent=11 // pred_region
        _
      $region16: #{pointnet_discriminator.1} parent=11 // pred_fallthru
        _
      // Predicated region
      $region17: #{pointnet_discriminator.1} parent=11 // pred_check
        %p399 = pneg %p103
      $region18: #{pointnet_discriminator.1} parent=11 // pred_check_branch
        %401 = sbr.rel (%p399) target = $region20
      $region19: #{pointnet_discriminator.1} parent=11 // pred_region
        _
      $region20: #{pointnet_discriminator.1} parent=11 // pred_fallthru
        _
      // Predicated region
      $region21: #{pointnet_discriminator.1} parent=11 // pred_check
        %p402 = pneg %p124
      $region22: #{pointnet_discriminator.1} parent=11 // pred_check_branch
        %404 = sbr.rel (%p402) target = $region24
      $region23: #{pointnet_discriminator.1} parent=11 // pred_region
        _
      $region24: #{pointnet_discriminator.1} parent=11 // pred_fallthru
        _
      // Predicated region
      $region25: #{pointnet_discriminator.1} parent=11 // pred_check
        %p405 = pneg %p145
      $region26: #{pointnet_discriminator.1} parent=11 // pred_check_branch
        %407 = sbr.rel (%p405) target = $region28
      $region27: #{pointnet_discriminator.1} parent=11 // pred_region
        _
      $region28: #{pointnet_discriminator.1} parent=11 // pred_fallthru
        _
      // Predicated region
      $region29: #{pointnet_discriminator.1} parent=11 // pred_check
        %p408 = pneg %p166
      $region30: #{pointnet_discriminator.1} parent=11 // pred_check_branch
        %410 = sbr.rel (%p408) target = $region32
      $region31: #{pointnet_discriminator.1} parent=11 // pred_region
        _
      $region32: #{pointnet_discriminator.1} parent=11 // pred_fallthru
        _
      // Predicated region
      $region33: #{pointnet_discriminator.1} parent=11 // pred_check
        %p411 = pneg %p187
      $region34: #{pointnet_discriminator.1} parent=11 // pred_check_branch
        %413 = sbr.rel (%p411) target = $region36
      $region35: #{pointnet_discriminator.1} parent=11 // pred_region
        _
      $region36: #{pointnet_discriminator.1} parent=11 // pred_fallthru
        _
      // Predicated region
      $region37: #{pointnet_discriminator.1} parent=11 // pred_check
        %p414 = pneg %p208
      $region38: #{pointnet_discriminator.1} parent=11 // pred_check_branch
        %416 = sbr.rel (%p414) target = $region40
      $region39: #{pointnet_discriminator.1} parent=11 // pred_region
        _
      $region40: #{pointnet_discriminator.1} parent=11 // pred_fallthru
        _
      // Predicated region
      $region41: #{pointnet_discriminator.1} parent=11 // pred_check
        %p417 = pneg %p229
      $region42: #{pointnet_discriminator.1} parent=11 // pred_check_branch
        %419 = sbr.rel (%p417) target = $region44
      $region43: #{pointnet_discriminator.1} parent=11 // pred_region
        _
      $region44: #{pointnet_discriminator.1} parent=11 // pred_fallthru
        _
      // Predicated region
      $region45: #{pointnet_discriminator.1} parent=11 // pred_check
        %p420 = pneg %p250
      $region46: #{pointnet_discriminator.1} parent=11 // pred_check_branch
        %422 = sbr.rel (%p420) target = $region48
      $region47: #{pointnet_discriminator.1} parent=11 // pred_region
        _
      $region48: #{pointnet_discriminator.1} parent=11 // pred_fallthru
        _
      // Predicated region
      $region49: #{pointnet_discriminator.1} parent=11 // pred_check
        %p423 = pneg %p271
      $region50: #{pointnet_discriminator.1} parent=11 // pred_check_branch
        %425 = sbr.rel (%p423) target = $region52
      $region51: #{pointnet_discriminator.1} parent=11 // pred_region
        _
      $region52: #{pointnet_discriminator.1} parent=11 // pred_fallthru
        _
      // Predicated region
      $region53: #{pointnet_discriminator.1} parent=11 // pred_check
        %p426 = pneg %p292
      $region54: #{pointnet_discriminator.1} parent=11 // pred_check_branch
        %428 = sbr.rel (%p426) target = $region56
      $region55: #{pointnet_discriminator.1} parent=11 // pred_region
        _
      $region56: #{pointnet_discriminator.1} parent=11 // pred_fallthru
        _
      // Predicated region
      $region57: #{pointnet_discriminator.1} parent=11 // pred_check
        %p429 = pneg %p313
      $region58: #{pointnet_discriminator.1} parent=11 // pred_check_branch
        %431 = sbr.rel (%p429) target = $region60
      $region59: #{pointnet_discriminator.1} parent=11 // pred_region
        _
      $region60: #{pointnet_discriminator.1} parent=11 // pred_fallthru
        _
      // Predicated region
      $region61: #{pointnet_discriminator.1} parent=11 // pred_check
        %p432 = pneg %p334
      $region62: #{pointnet_discriminator.1} parent=11 // pred_check_branch
        %434 = sbr.rel (%p432) target = $region64
      $region63: #{pointnet_discriminator.1} parent=11 // pred_region
        _
      $region64: #{pointnet_discriminator.1} parent=11 // pred_fallthru
        _
      // Predicated region
      $region65: #{pointnet_discriminator.1} parent=11 // pred_check
        %p435 = pneg %p355
      $region66: #{pointnet_discriminator.1} parent=11 // pred_check_branch
        %437 = sbr.rel (%p435) target = $region68
      $region67: #{pointnet_discriminator.1} parent=11 // pred_region
        _
      $region68: #{pointnet_discriminator.1} parent=11 // pred_fallthru
        _
    $region12: #{pointnet_discriminator.1} parent=5 // pred_fallthru
      _
    %p438 = scmp.lt.s32.totalorder %s21, 2
    // Predicated region
    $region69: #{pointnet_discriminator.1} parent=5 // pred_check
      %p439 = pneg %p438
    $region70: #{pointnet_discriminator.1} parent=5 // pred_check_branch
      %441 = sbr.rel (%p439) target = $region72
    $region71: #{pointnet_discriminator.1} parent=5 // pred_region
      // Predicated region
      $region73: #{pointnet_discriminator.1} parent=71 // pred_check
        %p442 = pneg %p55
      $region74: #{pointnet_discriminator.1} parent=71 // pred_check_branch
        %444 = sbr.rel (%p442) target = $region76
      $region75: #{pointnet_discriminator.1} parent=71 // pred_region
        %s445 = smul.u32 2, %s29
        %p446 = scmp.lt.s32.totalorder %s28, 1
        %s447 = scalar_select %p446, %s28, 1
        %p448 = scmp.lt.s32.totalorder %s445, 1
        %s449 = scalar_select %p448, %s445, 1
        %s450 = smul.addr %s447, 2
        %s451 = sadd.s32 %s449, %s450
        %s452 = smul.addr %s451, 8
        %s453 = scalar_lea.vmem %s0, %s452
        %s454 = smul.u32 2, %s29
      $region76: #{pointnet_discriminator.1} parent=71 // pred_fallthru
        _
    $region72: #{pointnet_discriminator.1} parent=5 // pred_fallthru
      _
    %p455 = scmp.le.s32.totalorder 1, %s21
    %p456 = scmp.lt.s32.totalorder %s21, 3
    %p457 = pnand %p455, %p456
    %p458 = pneg %p457
    // Predicated region
    $region77: #{pointnet_discriminator.1} parent=5 // pred_check
      _
    $region78: #{pointnet_discriminator.1} parent=5 // pred_check_branch
      %460 = sbr.rel (%p457) target = $region80
    $region79: #{pointnet_discriminator.1} parent=5 // pred_region
      %s461 = ssub.s32 %s21, 1
      %s462 = smul.u32 2, %s31
      %p463 = scmp.lt.s32.totalorder %s30, 1
      %s464 = scalar_select %p463, %s30, 1
      %p465 = scmp.lt.s32.totalorder %s462, 1
      %s466 = scalar_select %p465, %s462, 1
      %s467 = smul.addr %s464, 2
      %s468 = sadd.s32 %s466, %s467
      %s469 = smul.addr %s468, 8
      %s470 = scalar_lea.vmem %s0, %s469
      %p471 = pneg %p61
      %p472 = pneg %p58
      %p473 = pneg %p82
      %p474 = pneg %p79
      %p475 = pneg %p103
      %p476 = pneg %p100
      %p477 = pneg %p124
      %p478 = pneg %p121
      %p479 = pneg %p145
      %p480 = pneg %p142
      %p481 = pneg %p166
      %p482 = pneg %p163
      %p483 = pneg %p187
      %p484 = pneg %p184
      %p485 = pneg %p208
      %p486 = pneg %p205
      %p487 = pneg %p229
      %p488 = pneg %p226
      %p489 = pneg %p250
      %p490 = pneg %p247
      %p491 = pneg %p271
      %p492 = pneg %p268
      %p493 = pneg %p292
      %p494 = pneg %p289
      %p495 = pneg %p313
      %p496 = pneg %p310
      %p497 = pneg %p334
      %p498 = pneg %p331
      %p499 = pneg %p355
      %p500 = pneg %p352
      %p501 = pneg %p381
      %p502 = pneg %p378
      %p503 = scmp.lt.s32.totalorder %s30, 1
      %s504 = scalar_select %p503, %s30, 1
      %s505 = scalar_lea.vmem %s15, %s504
      %s506 = smul.u32 2, %s31
      %p507 = scmp.lt.s32.totalorder %s30, 1
      %s508 = scalar_select %p507, %s30, 1
      %p509 = scmp.lt.s32.totalorder %s506, 1
      %s510 = scalar_select %p509, %s506, 1
      %s511 = smul.addr %s508, 2
      %s512 = sadd.s32 %s510, %s511
      %s513 = smul.addr %s512, 8
      %s514 = scalar_lea.vmem %s0, %s513
      %s515 = smul.u32 2, %s31
      %p516 = scmp.lt.s32.totalorder %s30, 1
      %s517 = scalar_select %p516, %s30, 1
      %s518 = scalar_lea.vmem %s15, %s517
      %p520 = scmp.eq.s32.totalorder %s31, 0
      // Predicated region
      $region81: #{pointnet_discriminator.1} parent=79 // pred_check
        %p521 = pneg %p520
      $region82: #{pointnet_discriminator.1} parent=79 // pred_check_branch
        %523 = sbr.rel (%p521) target = $region84
      $region83: #{pointnet_discriminator.1} parent=79 // pred_region
        %v524 = vlaneseq
        %vm525 = vcmp.ge.s32.totalorder %v524, 0
        %vm526 = vcmp.lt.s32.totalorder %v524, 512
        %vm527 = vmand %vm525, %vm526
        %528 = vst.msk [vmem:[#allocation2] sm:$0xf] %vm527, -inf
      $region84: #{pointnet_discriminator.1} parent=79 // pred_fallthru
        _
      %v529 = vld [vmem:[%s514] sm:$0xff]
      %v530 = vld [vmem:[%s514 + $0x8] sm:$0xff]
      %v531 = vld [vmem:[%s2] sm:$0x1]
      %v532 = vld [vmem:[%s1] sm:$0x1]
      %534 = vset.pattern.permute.xlu0 0
      %535 = vperm.xlu0 %534, %v529
      %v536 = vpop.permute.xlu0 %535
      %539 = vset.pattern.permute.xlu0 0
      %540 = vperm.xlu0 %539, %v530
      %v541 = vpop.permute.xlu0 %540
      %v543 = vlaneseq
      %v544 = vshrl.u32 %v543, 7
      %v545 = vsub.s32 0, %v544
      %v546 = vrot.slane %v532, %v545
      %v547 = vmul.f32 %v536, %v546
      %v548 = vmul.f32 %v541, %v546
      %v550 = vlaneseq
      %v551 = vshrl.u32 %v550, 7
      %v552 = vsub.s32 0, %v551
      %v553 = vrot.slane %v531, %v552
      %v555 = vadd.f32 %v553, %v547
      %v556 = vadd.f32 %v553, %v548
      %v557 = vld [vmem:[%s1 + $0x1] sm:$0x1]
      %558 = vset.pattern.permute.xlu0 1
      %559 = vperm.xlu0 %558, %v529
      %v560 = vpop.permute.xlu0 %559
      %562 = vset.pattern.permute.xlu0 1
      %563 = vperm.xlu0 %562, %v530
      %v564 = vpop.permute.xlu0 %563
      %v566 = vlaneseq
      %v567 = vshrl.u32 %v566, 7
      %v568 = vsub.s32 0, %v567
      %v569 = vrot.slane %v557, %v568
      %v570 = vmul.f32 %v560, %v569
      %v571 = vmul.f32 %v564, %v569
      %v572 = vadd.f32 %v555, %v570
      %v573 = vadd.f32 %v556, %v571
      %v574 = vld [vmem:[%s1 + $0x2] sm:$0x1]
      %575 = vset.pattern.permute.xlu0 2
      %576 = vperm.xlu0 %575, %v529
      %v577 = vpop.permute.xlu0 %576
      %579 = vset.pattern.permute.xlu0 2
      %580 = vperm.xlu0 %579, %v530
      %v581 = vpop.permute.xlu0 %580
      %v583 = vlaneseq
      %v584 = vshrl.u32 %v583, 7
      %v585 = vsub.s32 0, %v584
      %v586 = vrot.slane %v574, %v585
      %v587 = vmul.f32 %v577, %v586
      %v588 = vmul.f32 %v581, %v586
      %v589 = vadd.f32 %v572, %v587
      %v590 = vadd.f32 %v573, %v588
      %vm591 = vcmp.gt.f32.partialorder %v589, 0.0
      %vm592 = vcmp.gt.f32.partialorder %v590, 0.0
      %v593 = vmul.f32 %v589, 0.2
      %v594 = vmul.f32 %v590, 0.2
      %v595 = vsel %vm591, %v589, %v593
      %v596 = vsel %vm592, %v590, %v594
      %v597 = vpack.c.bf16 %v596, %v595
      %v598 = vld [vmem:[%s3] sm:$0xf]
      %v599 = vld [vmem:[%s3 + $0x4] sm:$0xf]
      %v600 = vld [vmem:[%s3 + $0x8] sm:$0xf]
      %v601 = vld [vmem:[%s3 + $0xc] sm:$0xf]
      %v602 = vld [vmem:[%s3 + $0x10] sm:$0xf]
      %v603 = vld [vmem:[%s3 + $0x14] sm:$0xf]
      %v604 = vld [vmem:[%s3 + $0x18] sm:$0xf]
      %v605 = vld [vmem:[%s3 + $0x1c] sm:$0xf]
      %v606 = vld [vmem:[%s4] sm:$0x1]
      %v608 = vlaneseq
      %v609 = vshrl.u32 %v608, 7
      %v610 = vsub.s32 0, %v609
      %v611 = vrot.slane %v606, %v610
      %v621 = vunpack.c.l.b16 %v598
      %v622 = vunpack.c.l.b16 %v599
      %v623 = vunpack.c.l.b16 %v600
      %v624 = vunpack.c.l.b16 %v601
      %v625 = vunpack.c.l.b16 %v602
      %v626 = vunpack.c.l.b16 %v603
      %v627 = vunpack.c.l.b16 %v604
      %v628 = vunpack.c.l.b16 %v605
      %v629 = vpack.c.b16 %v622, %v621
      %v630 = vpack.c.b16 %v624, %v623
      %v631 = vpack.c.b16 %v626, %v625
      %v632 = vpack.c.b16 %v628, %v627
      %vm637 = vcmask 523264
      %v639 = vsel %vm637, %v597, 0
      %641 = vmatprep.subr.bf16.mxu0 0
      %642 = vmatpush1.bf16.msra.mxu0 %v629
      %643 = vmatprep.subr.bf16.mxu0 0
      %644 = vmatpush1.bf16.msra.mxu0 %v630
      %645 = vmatprep.subr.bf16.mxu0 0
      %646 = vmatpush1.bf16.msra.mxu0 %v631
      %647 = vmatprep.subr.bf16.mxu0 0
      %648 = vmatpush1.bf16.msra.mxu0 %v632
      %649 = vmatprep.subr.bf16.mxu0 0
      %650 = vmatpush1.bf16.msra.mxu0 0
      %651 = vmatprep.subr.bf16.mxu0 0
      %652 = vmatpush1.bf16.msra.mxu0 0
      %653 = vmatprep.subr.bf16.mxu0 0
      %654 = vmatpush1.bf16.msra.mxu0 0
      %655 = vmatprep.subr.bf16.mxu0 0
      %656 = vmatpush1.bf16.msra.mxu0 0
      %657 = vmatprep.subr.bf16.mxu0 0
      %658 = vmatpush1.bf16.msra.mxu0 0
      %659 = vmatprep.subr.bf16.mxu0 0
      %660 = vmatpush1.bf16.msra.mxu0 0
      %661 = vmatprep.subr.bf16.mxu0 0
      %662 = vmatpush1.bf16.msra.mxu0 0
      %663 = vmatprep.subr.bf16.mxu0 0
      %664 = vmatpush1.bf16.msra.mxu0 0
      %665 = vmatprep.subr.bf16.mxu0 0
      %666 = vmatpush1.bf16.msra.mxu0 0
      %667 = vmatprep.subr.bf16.mxu0 0
      %668 = vmatpush1.bf16.msra.mxu0 0
      %669 = vmatprep.subr.bf16.mxu0 0
      %670 = vmatpush1.bf16.msra.mxu0 0
      %671 = vmatprep.subr.bf16.mxu0 0
      %672 = vmatpush1.bf16.msra.mxu0 0
      %673 = vmatprep.mubr.bf16.mxu0 0
      %674 = vmatmul.mubr.bf16.gmra.mrb[0].mxu0 %v639
      %v675 = vpop.f32.mrb[0].mxu0
      %v676 = vadd.f32 %v611, %v675
      %v677 = vpop.f32.mrb[0].mxu0
      %v678 = vpop.f32.mrb[0].mxu0
      %v679 = vadd.f32 %v611, %v678
      %v680 = vpop.f32.mrb[0].mxu0
      %681 = vdwg.mxu0
      %vm682 = vcmp.gt.f32.partialorder %v676, 0.0
      %vm683 = vcmp.gt.f32.partialorder %v679, 0.0
      %v684 = vmul.f32 %v676, 0.2
      %v685 = vmul.f32 %v679, 0.2
      %v686 = vsel %vm682, %v676, %v684
      %v687 = vsel %vm683, %v679, %v685
      %v688 = vpack.c.bf16 %v687, %v686
      %v689 = vld [vmem:[%s5] sm:$0xf]
      %v690 = vld [vmem:[%s5 + $0x4] sm:$0xf]
      %v691 = vld [vmem:[%s5 + $0x8] sm:$0xf]
      %v692 = vld [vmem:[%s5 + $0xc] sm:$0xf]
      %v693 = vld [vmem:[%s5 + $0x10] sm:$0xf]
      %v694 = vld [vmem:[%s5 + $0x14] sm:$0xf]
      %v695 = vld [vmem:[%s5 + $0x18] sm:$0xf]
      %v696 = vld [vmem:[%s5 + $0x1c] sm:$0xf]
      %v697 = vld [vmem:[%s6] sm:$0x1]
      %v699 = vlaneseq
      %v700 = vshrl.u32 %v699, 7
      %v701 = vsub.s32 0, %v700
      %v702 = vrot.slane %v697, %v701
      %v712 = vunpack.c.l.b16 %v689
      %v713 = vunpack.c.l.b16 %v690
      %v714 = vunpack.c.l.b16 %v691
      %v715 = vunpack.c.l.b16 %v692
      %v716 = vunpack.c.l.b16 %v693
      %v717 = vunpack.c.l.b16 %v694
      %v718 = vunpack.c.l.b16 %v695
      %v719 = vunpack.c.l.b16 %v696
      %v720 = vpack.c.b16 %v713, %v712
      %v721 = vpack.c.b16 %v715, %v714
      %v722 = vpack.c.b16 %v717, %v716
      %v723 = vpack.c.b16 %v719, %v718
      %v729 = vsel %vm637, %v688, 0
      %731 = vmatprep.subr.bf16.mxu0 0
      %732 = vmatpush1.bf16.msra.mxu0 %v720
      %733 = vmatprep.subr.bf16.mxu0 0
      %734 = vmatpush1.bf16.msra.mxu0 %v721
      %735 = vmatprep.subr.bf16.mxu0 0
      %736 = vmatpush1.bf16.msra.mxu0 %v722
      %737 = vmatprep.subr.bf16.mxu0 0
      %738 = vmatpush1.bf16.msra.mxu0 %v723
      %739 = vmatprep.subr.bf16.mxu0 0
      %740 = vmatpush1.bf16.msra.mxu0 0
      %741 = vmatprep.subr.bf16.mxu0 0
      %742 = vmatpush1.bf16.msra.mxu0 0
      %743 = vmatprep.subr.bf16.mxu0 0
      %744 = vmatpush1.bf16.msra.mxu0 0
      %745 = vmatprep.subr.bf16.mxu0 0
      %746 = vmatpush1.bf16.msra.mxu0 0
      %747 = vmatprep.subr.bf16.mxu0 0
      %748 = vmatpush1.bf16.msra.mxu0 0
      %749 = vmatprep.subr.bf16.mxu0 0
      %750 = vmatpush1.bf16.msra.mxu0 0
      %751 = vmatprep.subr.bf16.mxu0 0
      %752 = vmatpush1.bf16.msra.mxu0 0
      %753 = vmatprep.subr.bf16.mxu0 0
      %754 = vmatpush1.bf16.msra.mxu0 0
      %755 = vmatprep.subr.bf16.mxu0 0
      %756 = vmatpush1.bf16.msra.mxu0 0
      %757 = vmatprep.subr.bf16.mxu0 0
      %758 = vmatpush1.bf16.msra.mxu0 0
      %759 = vmatprep.subr.bf16.mxu0 0
      %760 = vmatpush1.bf16.msra.mxu0 0
      %761 = vmatprep.subr.bf16.mxu0 0
      %762 = vmatpush1.bf16.msra.mxu0 0
      %763 = vmatprep.mubr.bf16.mxu0 0
      %764 = vmatmul.mubr.bf16.gmra.mrb[0].mxu0 %v729
      %v765 = vpop.f32.mrb[0].mxu0
      %v766 = vadd.f32 %v702, %v765
      %v767 = vpop.f32.mrb[0].mxu0
      %v768 = vpop.f32.mrb[0].mxu0
      %v769 = vadd.f32 %v702, %v768
      %v770 = vpop.f32.mrb[0].mxu0
      %771 = vdwg.mxu0
      %vm772 = vcmp.gt.f32.partialorder %v766, 0.0
      %vm773 = vcmp.gt.f32.partialorder %v769, 0.0
      %v774 = vmul.f32 %v766, 0.2
      %v775 = vmul.f32 %v769, 0.2
      %v776 = vsel %vm772, %v766, %v774
      %v777 = vsel %vm773, %v769, %v775
      %v778 = vpack.c.bf16 %v777, %v776
      %v779 = vld [vmem:[%s7] sm:$0xff]
      %v780 = vld [vmem:[%s7 + $0x8] sm:$0xff]
      %v781 = vld [vmem:[%s7 + $0x10] sm:$0xff]
      %v782 = vld [vmem:[%s7 + $0x18] sm:$0xff]
      %v783 = vld [vmem:[%s7 + $0x20] sm:$0xff]
      %v784 = vld [vmem:[%s7 + $0x28] sm:$0xff]
      %v785 = vld [vmem:[%s7 + $0x30] sm:$0xff]
      %v786 = vld [vmem:[%s7 + $0x38] sm:$0xff]
      %v787 = vld [vmem:[%s7 + $0x40] sm:$0xff]
      %v788 = vld [vmem:[%s7 + $0x48] sm:$0xff]
      %v789 = vld [vmem:[%s7 + $0x50] sm:$0xff]
      %v790 = vld [vmem:[%s7 + $0x58] sm:$0xff]
      %v791 = vld [vmem:[%s7 + $0x60] sm:$0xff]
      %v792 = vld [vmem:[%s7 + $0x68] sm:$0xff]
      %v793 = vld [vmem:[%s7 + $0x70] sm:$0xff]
      %v794 = vld [vmem:[%s7 + $0x78] sm:$0xff]
      %v795 = vld [vmem:[%s7 + $0x80] sm:$0xff]
      %v796 = vld [vmem:[%s7 + $0x88] sm:$0xff]
      %v797 = vld [vmem:[%s7 + $0x90] sm:$0xff]
      %v798 = vld [vmem:[%s7 + $0x98] sm:$0xff]
      %v799 = vld [vmem:[%s7 + $0xa0] sm:$0xff]
      %v800 = vld [vmem:[%s7 + $0xa8] sm:$0xff]
      %v801 = vld [vmem:[%s7 + $0xb0] sm:$0xff]
      %v802 = vld [vmem:[%s7 + $0xb8] sm:$0xff]
      %v803 = vld [vmem:[%s7 + $0xc0] sm:$0xff]
      %v804 = vld [vmem:[%s7 + $0xc8] sm:$0xff]
      %v805 = vld [vmem:[%s7 + $0xd0] sm:$0xff]
      %v806 = vld [vmem:[%s7 + $0xd8] sm:$0xff]
      %v807 = vld [vmem:[%s7 + $0xe0] sm:$0xff]
      %v808 = vld [vmem:[%s7 + $0xe8] sm:$0xff]
      %v809 = vld [vmem:[%s7 + $0xf0] sm:$0xff]
      %v810 = vld [vmem:[%s7 + $0xf8] sm:$0xff]
      %v811 = vld [vmem:[%s8] sm:$0xf]
      %v813 = vlaneseq
      %v814 = vshrl.u32 %v813, 7
      %v815 = vsub.s32 0, %v814
      %v816 = vrot.slane %v811, %v815
      %v817 = vlaneseq
      %v818 = vshrl.u32 %v817, 7
      %v819 = vsub.s32 1, %v818
      %v820 = vrot.slane %v811, %v819
      %v821 = vlaneseq
      %v822 = vshrl.u32 %v821, 7
      %v823 = vsub.s32 2, %v822
      %v824 = vrot.slane %v811, %v823
      %v825 = vlaneseq
      %v826 = vshrl.u32 %v825, 7
      %v827 = vsub.s32 3, %v826
      %v828 = vrot.slane %v811, %v827
      %v865 = vunpack.c.l.b16 %v779
      %v866 = vunpack.c.h.b16 %v779
      %v867 = vunpack.c.l.b16 %v780
      %v868 = vunpack.c.h.b16 %v780
      %v869 = vunpack.c.l.b16 %v781
      %v870 = vunpack.c.h.b16 %v781
      %v871 = vunpack.c.l.b16 %v782
      %v872 = vunpack.c.h.b16 %v782
      %v873 = vunpack.c.l.b16 %v783
      %v874 = vunpack.c.h.b16 %v783
      %v875 = vunpack.c.l.b16 %v784
      %v876 = vunpack.c.h.b16 %v784
      %v877 = vunpack.c.l.b16 %v785
      %v878 = vunpack.c.h.b16 %v785
      %v879 = vunpack.c.l.b16 %v786
      %v880 = vunpack.c.h.b16 %v786
      %v881 = vunpack.c.l.b16 %v787
      %v882 = vunpack.c.h.b16 %v787
      %v883 = vunpack.c.l.b16 %v788
      %v884 = vunpack.c.h.b16 %v788
      %v885 = vunpack.c.l.b16 %v789
      %v886 = vunpack.c.h.b16 %v789
      %v887 = vunpack.c.l.b16 %v790
      %v888 = vunpack.c.h.b16 %v790
      %v889 = vunpack.c.l.b16 %v791
      %v890 = vunpack.c.h.b16 %v791
      %v891 = vunpack.c.l.b16 %v792
      %v892 = vunpack.c.h.b16 %v792
      %v893 = vunpack.c.l.b16 %v793
      %v894 = vunpack.c.h.b16 %v793
      %v895 = vunpack.c.l.b16 %v794
      %v896 = vunpack.c.h.b16 %v794
      %v897 = vunpack.c.l.b16 %v795
      %v898 = vunpack.c.h.b16 %v795
      %v899 = vunpack.c.l.b16 %v796
      %v900 = vunpack.c.h.b16 %v796
      %v901 = vunpack.c.l.b16 %v797
      %v902 = vunpack.c.h.b16 %v797
      %v903 = vunpack.c.l.b16 %v798
      %v904 = vunpack.c.h.b16 %v798
      %v905 = vunpack.c.l.b16 %v799
      %v906 = vunpack.c.h.b16 %v799
      %v907 = vunpack.c.l.b16 %v800
      %v908 = vunpack.c.h.b16 %v800
      %v909 = vunpack.c.l.b16 %v801
      %v910 = vunpack.c.h.b16 %v801
      %v911 = vunpack.c.l.b16 %v802
      %v912 = vunpack.c.h.b16 %v802
      %v913 = vunpack.c.l.b16 %v803
      %v914 = vunpack.c.h.b16 %v803
      %v915 = vunpack.c.l.b16 %v804
      %v916 = vunpack.c.h.b16 %v804
      %v917 = vunpack.c.l.b16 %v805
      %v918 = vunpack.c.h.b16 %v805
      %v919 = vunpack.c.l.b16 %v806
      %v920 = vunpack.c.h.b16 %v806
      %v921 = vunpack.c.l.b16 %v807
      %v922 = vunpack.c.h.b16 %v807
      %v923 = vunpack.c.l.b16 %v808
      %v924 = vunpack.c.h.b16 %v808
      %v925 = vunpack.c.l.b16 %v809
      %v926 = vunpack.c.h.b16 %v809
      %v927 = vunpack.c.l.b16 %v810
      %v928 = vunpack.c.h.b16 %v810
      %v929 = vpack.c.b16 %v869, %v865
      %v930 = vpack.c.b16 %v870, %v866
      %v931 = vpack.c.b16 %v871, %v867
      %v932 = vpack.c.b16 %v872, %v868
      %v933 = vpack.c.b16 %v877, %v873
      %v934 = vpack.c.b16 %v878, %v874
      %v935 = vpack.c.b16 %v879, %v875
      %v936 = vpack.c.b16 %v880, %v876
      %v937 = vpack.c.b16 %v885, %v881
      %v938 = vpack.c.b16 %v886, %v882
      %v939 = vpack.c.b16 %v887, %v883
      %v940 = vpack.c.b16 %v888, %v884
      %v941 = vpack.c.b16 %v893, %v889
      %v942 = vpack.c.b16 %v894, %v890
      %v943 = vpack.c.b16 %v895, %v891
      %v944 = vpack.c.b16 %v896, %v892
      %v945 = vpack.c.b16 %v901, %v897
      %v946 = vpack.c.b16 %v902, %v898
      %v947 = vpack.c.b16 %v903, %v899
      %v948 = vpack.c.b16 %v904, %v900
      %v949 = vpack.c.b16 %v909, %v905
      %v950 = vpack.c.b16 %v910, %v906
      %v951 = vpack.c.b16 %v911, %v907
      %v952 = vpack.c.b16 %v912, %v908
      %v953 = vpack.c.b16 %v917, %v913
      %v954 = vpack.c.b16 %v918, %v914
      %v955 = vpack.c.b16 %v919, %v915
      %v956 = vpack.c.b16 %v920, %v916
      %v957 = vpack.c.b16 %v925, %v921
      %v958 = vpack.c.b16 %v926, %v922
      %v959 = vpack.c.b16 %v927, %v923
      %v960 = vpack.c.b16 %v928, %v924
      %993 = vmatprep.subr.bf16.mxu0 %v930
      %994 = vmatpush1.bf16.msra.mxu0 %v929
      %995 = vmatprep.subr.bf16.mxu0 %v934
      %996 = vmatpush1.bf16.msra.mxu0 %v933
      %997 = vmatprep.subr.bf16.mxu0 %v938
      %998 = vmatpush1.bf16.msra.mxu0 %v937
      %999 = vmatprep.subr.bf16.mxu0 %v942
      %1000 = vmatpush1.bf16.msra.mxu0 %v941
      %1001 = vmatprep.subr.bf16.mxu0 %v946
      %1002 = vmatpush1.bf16.msra.mxu0 %v945
      %1003 = vmatprep.subr.bf16.mxu0 %v950
      %1004 = vmatpush1.bf16.msra.mxu0 %v949
      %1005 = vmatprep.subr.bf16.mxu0 %v954
      %1006 = vmatpush1.bf16.msra.mxu0 %v953
      %1007 = vmatprep.subr.bf16.mxu0 %v958
      %1008 = vmatpush1.bf16.msra.mxu0 %v957
      %1009 = vmatprep.subr.bf16.mxu0 0
      %1010 = vmatpush1.bf16.msra.mxu0 0
      %1011 = vmatprep.subr.bf16.mxu0 0
      %1012 = vmatpush1.bf16.msra.mxu0 0
      %1013 = vmatprep.subr.bf16.mxu0 0
      %1014 = vmatpush1.bf16.msra.mxu0 0
      %1015 = vmatprep.subr.bf16.mxu0 0
      %1016 = vmatpush1.bf16.msra.mxu0 0
      %1017 = vmatprep.subr.bf16.mxu0 0
      %1018 = vmatpush1.bf16.msra.mxu0 0
      %1019 = vmatprep.subr.bf16.mxu0 0
      %1020 = vmatpush1.bf16.msra.mxu0 0
      %1021 = vmatprep.subr.bf16.mxu0 0
      %1022 = vmatpush1.bf16.msra.mxu0 0
      %1023 = vmatprep.subr.bf16.mxu0 0
      %1024 = vmatpush1.bf16.msra.mxu0 0
      %1025 = vmatprep.mubr.bf16.mxu0 0
      %1026 = vmatmul.mubr.bf16.gmra.mrb[0].mxu0 %v778
      %v1027 = vpop.f32.mrb[0].mxu0
      %v1028 = vadd.f32 %v816, %v1027
      %v1029 = vpop.f32.mrb[0].mxu0
      %v1030 = vadd.f32 %v820, %v1029
      %v1031 = vpop.f32.mrb[0].mxu0
      %v1032 = vadd.f32 %v816, %v1031
      %v1033 = vpop.f32.mrb[0].mxu0
      %v1034 = vadd.f32 %v820, %v1033
      %1035 = vdwg.mxu0
      %1036 = vmatprep.subr.bf16.mxu0 %v932
      %1037 = vmatpush1.bf16.msra.mxu0 %v931
      %1038 = vmatprep.subr.bf16.mxu0 %v936
      %1039 = vmatpush1.bf16.msra.mxu0 %v935
      %1040 = vmatprep.subr.bf16.mxu0 %v940
      %1041 = vmatpush1.bf16.msra.mxu0 %v939
      %1042 = vmatprep.subr.bf16.mxu0 %v944
      %1043 = vmatpush1.bf16.msra.mxu0 %v943
      %1044 = vmatprep.subr.bf16.mxu0 %v948
      %1045 = vmatpush1.bf16.msra.mxu0 %v947
      %1046 = vmatprep.subr.bf16.mxu0 %v952
      %1047 = vmatpush1.bf16.msra.mxu0 %v951
      %1048 = vmatprep.subr.bf16.mxu0 %v956
      %1049 = vmatpush1.bf16.msra.mxu0 %v955
      %1050 = vmatprep.subr.bf16.mxu0 %v960
      %1051 = vmatpush1.bf16.msra.mxu0 %v959
      %1052 = vmatprep.subr.bf16.mxu0 0
      %1053 = vmatpush1.bf16.msra.mxu0 0
      %1054 = vmatprep.subr.bf16.mxu0 0
      %1055 = vmatpush1.bf16.msra.mxu0 0
      %1056 = vmatprep.subr.bf16.mxu0 0
      %1057 = vmatpush1.bf16.msra.mxu0 0
      %1058 = vmatprep.subr.bf16.mxu0 0
      %1059 = vmatpush1.bf16.msra.mxu0 0
      %1060 = vmatprep.subr.bf16.mxu0 0
      %1061 = vmatpush1.bf16.msra.mxu0 0
      %1062 = vmatprep.subr.bf16.mxu0 0
      %1063 = vmatpush1.bf16.msra.mxu0 0
      %1064 = vmatprep.subr.bf16.mxu0 0
      %1065 = vmatpush1.bf16.msra.mxu0 0
      %1066 = vmatprep.subr.bf16.mxu0 0
      %1067 = vmatpush1.bf16.msra.mxu0 0
      %1068 = vmatprep.mubr.bf16.mxu0 0
      %1069 = vmatmul.mubr.bf16.gmra.mrb[0].mxu0 %v778
      %v1070 = vpop.f32.mrb[0].mxu0
      %v1071 = vadd.f32 %v824, %v1070
      %v1072 = vpop.f32.mrb[0].mxu0
      %v1073 = vadd.f32 %v828, %v1072
      %v1074 = vpop.f32.mrb[0].mxu0
      %v1075 = vadd.f32 %v824, %v1074
      %v1076 = vpop.f32.mrb[0].mxu0
      %v1077 = vadd.f32 %v828, %v1076
      %1078 = vdwg.mxu0
      %v1079 = vmax.f32 %v1028, %v1032
      %v1080 = vrot.slane %v1079, 4
      %v1081 = vmax.f32 %v1079, %v1080
      %v1082 = vrot.slane %v1081, 2
      %v1083 = vmax.f32 %v1081, %v1082
      %v1084 = vrot.slane %v1083, 1
      %v1085 = vmax.f32 %v1083, %v1084
      %v1086 = vmax.f32 %v1030, %v1034
      %v1087 = vrot.slane %v1086, 4
      %v1088 = vmax.f32 %v1086, %v1087
      %v1089 = vrot.slane %v1088, 2
      %v1090 = vmax.f32 %v1088, %v1089
      %v1091 = vrot.slane %v1090, 1
      %v1092 = vmax.f32 %v1090, %v1091
      %v1093 = vmax.f32 %v1071, %v1075
      %v1094 = vrot.slane %v1093, 4
      %v1095 = vmax.f32 %v1093, %v1094
      %v1096 = vrot.slane %v1095, 2
      %v1097 = vmax.f32 %v1095, %v1096
      %v1098 = vrot.slane %v1097, 1
      %v1099 = vmax.f32 %v1097, %v1098
      %v1100 = vmax.f32 %v1073, %v1077
      %v1101 = vrot.slane %v1100, 4
      %v1102 = vmax.f32 %v1100, %v1101
      %v1103 = vrot.slane %v1102, 2
      %v1104 = vmax.f32 %v1102, %v1103
      %v1105 = vrot.slane %v1104, 1
      %v1106 = vmax.f32 %v1104, %v1105
      %v1107 = vld [vmem:[#allocation2] sm:$0xf]
      %v1112 = vcombine.low %v1085, %v1092
      %v1113 = vcombine.low %v1099, %v1106
      %v1115 = vunpack.c.l.s4 1966171168
      %v1116 = vunpack.c.0.s8 %v1115
      %v1117 = vlaneseq
      %v1118 = vshrl.u32 %v1117, 7
      %v1119 = vsub.s32 %v1116, %v1118
      %v1120 = vrot.slane %v1112, %v1119
      %v1122 = vunpack.c.l.s4 1966171168
      %v1123 = vunpack.c.0.s8 %v1122
      %v1124 = vlaneseq
      %v1125 = vshrl.u32 %v1124, 7
      %v1126 = vsub.s32 %v1123, %v1125
      %v1127 = vrot.slane %v1113, %v1126
      %v1128 = vcombine.low %v1120, %v1127
      %v1130 = vunpack.c.l.s4 1966171168
      %v1131 = vunpack.c.0.s8 %v1130
      %v1132 = vlaneseq
      %v1133 = vshrl.u32 %v1132, 7
      %v1134 = vsub.s32 %v1131, %v1133
      %v1135 = vrot.slane %v1128, %v1134
      %v1137 = vmax.f32 %v1107, %v1135
      %v1138 = vlaneseq
      %vm1139 = vcmp.ge.s32.totalorder %v1138, 0
      %vm1140 = vcmp.lt.s32.totalorder %v1138, 512
      %vm1141 = vmand %vm1139, %vm1140
      %1142 = vst.msk [vmem:[#allocation2] sm:$0xf] %vm1141, %v1137
      // Predicated region
      $region85: #{pointnet_discriminator.1} parent=79 // pred_check
        %p1143 = pneg %p520
      $region86: #{pointnet_discriminator.1} parent=79 // pred_check_branch
        %1145 = sbr.rel (%p1143) target = $region88
      $region87: #{pointnet_discriminator.1} parent=79 // pred_region
        %v1146 = vld [vmem:[#allocation2] sm:$0xf]
        %v1148 = vlaneseq
        %v1149 = vshrl.u32 %v1148, 7
        %v1150 = vsub.s32 0, %v1149
        %v1151 = vrot.slane %v1146, %v1150
        %v1152 = vlaneseq
        %v1153 = vshrl.u32 %v1152, 7
        %v1154 = vsub.s32 1, %v1153
        %v1155 = vrot.slane %v1146, %v1154
        %v1156 = vlaneseq
        %v1157 = vshrl.u32 %v1156, 7
        %v1158 = vsub.s32 2, %v1157
        %v1159 = vrot.slane %v1146, %v1158
        %v1160 = vlaneseq
        %v1161 = vshrl.u32 %v1160, 7
        %v1162 = vsub.s32 3, %v1161
        %v1163 = vrot.slane %v1146, %v1162
        %v1168 = vpack.c.bf16 %v1151, %v1151
        %v1169 = vpack.c.bf16 %v1155, %v1155
        %v1170 = vpack.c.bf16 %v1159, %v1159
        %v1171 = vpack.c.bf16 %v1163, %v1163
        %v1172 = vld [vmem:[%s9] sm:$0xf]
        %v1173 = vld [vmem:[%s9 + $0x4] sm:$0xf]
        %v1174 = vld [vmem:[%s9 + $0x8] sm:$0xf]
        %v1175 = vld [vmem:[%s9 + $0xc] sm:$0xf]
        %v1176 = vld [vmem:[%s9 + $0x10] sm:$0xf]
        %v1177 = vld [vmem:[%s9 + $0x14] sm:$0xf]
        %v1178 = vld [vmem:[%s9 + $0x18] sm:$0xf]
        %v1179 = vld [vmem:[%s9 + $0x1c] sm:$0xf]
        %v1180 = vld [vmem:[%s9 + $0x20] sm:$0xf]
        %v1181 = vld [vmem:[%s9 + $0x24] sm:$0xf]
        %v1182 = vld [vmem:[%s9 + $0x28] sm:$0xf]
        %v1183 = vld [vmem:[%s9 + $0x2c] sm:$0xf]
        %v1184 = vld [vmem:[%s9 + $0x30] sm:$0xf]
        %v1185 = vld [vmem:[%s9 + $0x34] sm:$0xf]
        %v1186 = vld [vmem:[%s9 + $0x38] sm:$0xf]
        %v1187 = vld [vmem:[%s9 + $0x3c] sm:$0xf]
        %v1188 = vld [vmem:[%s9 + $0x40] sm:$0xf]
        %v1189 = vld [vmem:[%s9 + $0x44] sm:$0xf]
        %v1190 = vld [vmem:[%s9 + $0x48] sm:$0xf]
        %v1191 = vld [vmem:[%s9 + $0x4c] sm:$0xf]
        %v1192 = vld [vmem:[%s9 + $0x50] sm:$0xf]
        %v1193 = vld [vmem:[%s9 + $0x54] sm:$0xf]
        %v1194 = vld [vmem:[%s9 + $0x58] sm:$0xf]
        %v1195 = vld [vmem:[%s9 + $0x5c] sm:$0xf]
        %v1196 = vld [vmem:[%s9 + $0x60] sm:$0xf]
        %v1197 = vld [vmem:[%s9 + $0x64] sm:$0xf]
        %v1198 = vld [vmem:[%s9 + $0x68] sm:$0xf]
        %v1199 = vld [vmem:[%s9 + $0x6c] sm:$0xf]
        %v1200 = vld [vmem:[%s9 + $0x70] sm:$0xf]
        %v1201 = vld [vmem:[%s9 + $0x74] sm:$0xf]
        %v1202 = vld [vmem:[%s9 + $0x78] sm:$0xf]
        %v1203 = vld [vmem:[%s9 + $0x7c] sm:$0xf]
        %v1204 = vld [vmem:[%s9 + $0x80] sm:$0xf]
        %v1205 = vld [vmem:[%s9 + $0x84] sm:$0xf]
        %v1206 = vld [vmem:[%s9 + $0x88] sm:$0xf]
        %v1207 = vld [vmem:[%s9 + $0x8c] sm:$0xf]
        %v1208 = vld [vmem:[%s9 + $0x90] sm:$0xf]
        %v1209 = vld [vmem:[%s9 + $0x94] sm:$0xf]
        %v1210 = vld [vmem:[%s9 + $0x98] sm:$0xf]
        %v1211 = vld [vmem:[%s9 + $0x9c] sm:$0xf]
        %v1212 = vld [vmem:[%s9 + $0xa0] sm:$0xf]
        %v1213 = vld [vmem:[%s9 + $0xa4] sm:$0xf]
        %v1214 = vld [vmem:[%s9 + $0xa8] sm:$0xf]
        %v1215 = vld [vmem:[%s9 + $0xac] sm:$0xf]
        %v1216 = vld [vmem:[%s9 + $0xb0] sm:$0xf]
        %v1217 = vld [vmem:[%s9 + $0xb4] sm:$0xf]
        %v1218 = vld [vmem:[%s9 + $0xb8] sm:$0xf]
        %v1219 = vld [vmem:[%s9 + $0xbc] sm:$0xf]
        %v1220 = vld [vmem:[%s9 + $0xc0] sm:$0xf]
        %v1221 = vld [vmem:[%s9 + $0xc4] sm:$0xf]
        %v1222 = vld [vmem:[%s9 + $0xc8] sm:$0xf]
        %v1223 = vld [vmem:[%s9 + $0xcc] sm:$0xf]
        %v1224 = vld [vmem:[%s9 + $0xd0] sm:$0xf]
        %v1225 = vld [vmem:[%s9 + $0xd4] sm:$0xf]
        %v1226 = vld [vmem:[%s9 + $0xd8] sm:$0xf]
        %v1227 = vld [vmem:[%s9 + $0xdc] sm:$0xf]
        %v1228 = vld [vmem:[%s9 + $0xe0] sm:$0xf]
        %v1229 = vld [vmem:[%s9 + $0xe4] sm:$0xf]
        %v1230 = vld [vmem:[%s9 + $0xe8] sm:$0xf]
        %v1231 = vld [vmem:[%s9 + $0xec] sm:$0xf]
        %v1232 = vld [vmem:[%s9 + $0xf0] sm:$0xf]
        %v1233 = vld [vmem:[%s9 + $0xf4] sm:$0xf]
        %v1234 = vld [vmem:[%s9 + $0xf8] sm:$0xf]
        %v1235 = vld [vmem:[%s9 + $0xfc] sm:$0xf]
        %v1236 = vld [vmem:[%s10] sm:$0x1]
        %v1301 = vunpack.c.l.b16 %v1172
        %v1302 = vunpack.c.l.b16 %v1173
        %v1303 = vunpack.c.l.b16 %v1174
        %v1304 = vunpack.c.l.b16 %v1175
        %v1305 = vunpack.c.l.b16 %v1176
        %v1306 = vunpack.c.l.b16 %v1177
        %v1307 = vunpack.c.l.b16 %v1178
        %v1308 = vunpack.c.l.b16 %v1179
        %v1309 = vunpack.c.l.b16 %v1180
        %v1310 = vunpack.c.l.b16 %v1181
        %v1311 = vunpack.c.l.b16 %v1182
        %v1312 = vunpack.c.l.b16 %v1183
        %v1313 = vunpack.c.l.b16 %v1184
        %v1314 = vunpack.c.l.b16 %v1185
        %v1315 = vunpack.c.l.b16 %v1186
        %v1316 = vunpack.c.l.b16 %v1187
        %v1317 = vunpack.c.l.b16 %v1188
        %v1318 = vunpack.c.l.b16 %v1189
        %v1319 = vunpack.c.l.b16 %v1190
        %v1320 = vunpack.c.l.b16 %v1191
        %v1321 = vunpack.c.l.b16 %v1192
        %v1322 = vunpack.c.l.b16 %v1193
        %v1323 = vunpack.c.l.b16 %v1194
        %v1324 = vunpack.c.l.b16 %v1195
        %v1325 = vunpack.c.l.b16 %v1196
        %v1326 = vunpack.c.l.b16 %v1197
        %v1327 = vunpack.c.l.b16 %v1198
        %v1328 = vunpack.c.l.b16 %v1199
        %v1329 = vunpack.c.l.b16 %v1200
        %v1330 = vunpack.c.l.b16 %v1201
        %v1331 = vunpack.c.l.b16 %v1202
        %v1332 = vunpack.c.l.b16 %v1203
        %v1333 = vunpack.c.l.b16 %v1204
        %v1334 = vunpack.c.l.b16 %v1205
        %v1335 = vunpack.c.l.b16 %v1206
        %v1336 = vunpack.c.l.b16 %v1207
        %v1337 = vunpack.c.l.b16 %v1208
        %v1338 = vunpack.c.l.b16 %v1209
        %v1339 = vunpack.c.l.b16 %v1210
        %v1340 = vunpack.c.l.b16 %v1211
        %v1341 = vunpack.c.l.b16 %v1212
        %v1342 = vunpack.c.l.b16 %v1213
        %v1343 = vunpack.c.l.b16 %v1214
        %v1344 = vunpack.c.l.b16 %v1215
        %v1345 = vunpack.c.l.b16 %v1216
        %v1346 = vunpack.c.l.b16 %v1217
        %v1347 = vunpack.c.l.b16 %v1218
        %v1348 = vunpack.c.l.b16 %v1219
        %v1349 = vunpack.c.l.b16 %v1220
        %v1350 = vunpack.c.l.b16 %v1221
        %v1351 = vunpack.c.l.b16 %v1222
        %v1352 = vunpack.c.l.b16 %v1223
        %v1353 = vunpack.c.l.b16 %v1224
        %v1354 = vunpack.c.l.b16 %v1225
        %v1355 = vunpack.c.l.b16 %v1226
        %v1356 = vunpack.c.l.b16 %v1227
        %v1357 = vunpack.c.l.b16 %v1228
        %v1358 = vunpack.c.l.b16 %v1229
        %v1359 = vunpack.c.l.b16 %v1230
        %v1360 = vunpack.c.l.b16 %v1231
        %v1361 = vunpack.c.l.b16 %v1232
        %v1362 = vunpack.c.l.b16 %v1233
        %v1363 = vunpack.c.l.b16 %v1234
        %v1364 = vunpack.c.l.b16 %v1235
        %v1365 = vpack.c.b16 %v1302, %v1301
        %v1366 = vpack.c.b16 %v1304, %v1303
        %v1367 = vpack.c.b16 %v1306, %v1305
        %v1368 = vpack.c.b16 %v1308, %v1307
        %v1369 = vpack.c.b16 %v1310, %v1309
        %v1370 = vpack.c.b16 %v1312, %v1311
        %v1371 = vpack.c.b16 %v1314, %v1313
        %v1372 = vpack.c.b16 %v1316, %v1315
        %v1373 = vpack.c.b16 %v1318, %v1317
        %v1374 = vpack.c.b16 %v1320, %v1319
        %v1375 = vpack.c.b16 %v1322, %v1321
        %v1376 = vpack.c.b16 %v1324, %v1323
        %v1377 = vpack.c.b16 %v1326, %v1325
        %v1378 = vpack.c.b16 %v1328, %v1327
        %v1379 = vpack.c.b16 %v1330, %v1329
        %v1380 = vpack.c.b16 %v1332, %v1331
        %v1381 = vpack.c.b16 %v1334, %v1333
        %v1382 = vpack.c.b16 %v1336, %v1335
        %v1383 = vpack.c.b16 %v1338, %v1337
        %v1384 = vpack.c.b16 %v1340, %v1339
        %v1385 = vpack.c.b16 %v1342, %v1341
        %v1386 = vpack.c.b16 %v1344, %v1343
        %v1387 = vpack.c.b16 %v1346, %v1345
        %v1388 = vpack.c.b16 %v1348, %v1347
        %v1389 = vpack.c.b16 %v1350, %v1349
        %v1390 = vpack.c.b16 %v1352, %v1351
        %v1391 = vpack.c.b16 %v1354, %v1353
        %v1392 = vpack.c.b16 %v1356, %v1355
        %v1393 = vpack.c.b16 %v1358, %v1357
        %v1394 = vpack.c.b16 %v1360, %v1359
        %v1395 = vpack.c.b16 %v1362, %v1361
        %v1396 = vpack.c.b16 %v1364, %v1363
        %1429 = vmatprep.subr.bf16.mxu0 0
        %1430 = vmatpush1.bf16.msra.mxu0 %v1365
        %1431 = vmatprep.subr.bf16.mxu0 0
        %1432 = vmatpush1.bf16.msra.mxu0 %v1366
        %1433 = vmatprep.subr.bf16.mxu0 0
        %1434 = vmatpush1.bf16.msra.mxu0 %v1367
        %1435 = vmatprep.subr.bf16.mxu0 0
        %1436 = vmatpush1.bf16.msra.mxu0 %v1368
        %1437 = vmatprep.subr.bf16.mxu0 0
        %1438 = vmatpush1.bf16.msra.mxu0 %v1369
        %1439 = vmatprep.subr.bf16.mxu0 0
        %1440 = vmatpush1.bf16.msra.mxu0 %v1370
        %1441 = vmatprep.subr.bf16.mxu0 0
        %1442 = vmatpush1.bf16.msra.mxu0 %v1371
        %1443 = vmatprep.subr.bf16.mxu0 0
        %1444 = vmatpush1.bf16.msra.mxu0 %v1372
        %1445 = vmatprep.subr.bf16.mxu0 0
        %1446 = vmatpush1.bf16.msra.mxu0 %v1373
        %1447 = vmatprep.subr.bf16.mxu0 0
        %1448 = vmatpush1.bf16.msra.mxu0 %v1374
        %1449 = vmatprep.subr.bf16.mxu0 0
        %1450 = vmatpush1.bf16.msra.mxu0 %v1375
        %1451 = vmatprep.subr.bf16.mxu0 0
        %1452 = vmatpush1.bf16.msra.mxu0 %v1376
        %1453 = vmatprep.subr.bf16.mxu0 0
        %1454 = vmatpush1.bf16.msra.mxu0 %v1377
        %1455 = vmatprep.subr.bf16.mxu0 0
        %1456 = vmatpush1.bf16.msra.mxu0 %v1378
        %1457 = vmatprep.subr.bf16.mxu0 0
        %1458 = vmatpush1.bf16.msra.mxu0 %v1379
        %1459 = vmatprep.subr.bf16.mxu0 0
        %1460 = vmatpush1.bf16.msra.mxu0 %v1380
        %1461 = vmatprep.mubr.bf16.mxu0 %v1169
        %1462 = vmatmul.mubr.bf16.gmra.mrb[0].mxu0 %v1168
        %v1463 = vpop.f32.mrb[0].mxu0
        %v1464 = vadd.f32 %v1236, %v1463
        %v1465 = vpop.f32.mrb[0].mxu0
        %v1466 = vpop.f32.mrb[0].mxu0
        %v1467 = vpop.f32.mrb[0].mxu0
        %1468 = vdwg.mxu0
        %1469 = vmatprep.subr.bf16.mxu0 0
        %1470 = vmatpush1.bf16.msra.mxu0 %v1381
        %1471 = vmatprep.subr.bf16.mxu0 0
        %1472 = vmatpush1.bf16.msra.mxu0 %v1382
        %1473 = vmatprep.subr.bf16.mxu0 0
        %1474 = vmatpush1.bf16.msra.mxu0 %v1383
        %1475 = vmatprep.subr.bf16.mxu0 0
        %1476 = vmatpush1.bf16.msra.mxu0 %v1384
        %1477 = vmatprep.subr.bf16.mxu0 0
        %1478 = vmatpush1.bf16.msra.mxu0 %v1385
        %1479 = vmatprep.subr.bf16.mxu0 0
        %1480 = vmatpush1.bf16.msra.mxu0 %v1386
        %1481 = vmatprep.subr.bf16.mxu0 0
        %1482 = vmatpush1.bf16.msra.mxu0 %v1387
        %1483 = vmatprep.subr.bf16.mxu0 0
        %1484 = vmatpush1.bf16.msra.mxu0 %v1388
        %1485 = vmatprep.subr.bf16.mxu0 0
        %1486 = vmatpush1.bf16.msra.mxu0 %v1389
        %1487 = vmatprep.subr.bf16.mxu0 0
        %1488 = vmatpush1.bf16.msra.mxu0 %v1390
        %1489 = vmatprep.subr.bf16.mxu0 0
        %1490 = vmatpush1.bf16.msra.mxu0 %v1391
        %1491 = vmatprep.subr.bf16.mxu0 0
        %1492 = vmatpush1.bf16.msra.mxu0 %v1392
        %1493 = vmatprep.subr.bf16.mxu0 0
        %1494 = vmatpush1.bf16.msra.mxu0 %v1393
        %1495 = vmatprep.subr.bf16.mxu0 0
        %1496 = vmatpush1.bf16.msra.mxu0 %v1394
        %1497 = vmatprep.subr.bf16.mxu0 0
        %1498 = vmatpush1.bf16.msra.mxu0 %v1395
        %1499 = vmatprep.subr.bf16.mxu0 0
        %1500 = vmatpush1.bf16.msra.mxu0 %v1396
        %1501 = vmatprep.mubr.bf16.mxu0 %v1171
        %1502 = vmatmul.mubr.bf16.gmra.mrb[0].mxu0 %v1170
        %v1503 = vpop.f32.mrb[0].mxu0
        %v1504 = vadd.f32 %v1464, %v1503
        %v1505 = vpop.f32.mrb[0].mxu0
        %v1506 = vpop.f32.mrb[0].mxu0
        %v1507 = vpop.f32.mrb[0].mxu0
        %1508 = vdwg.mxu0
        %vm1509 = vcmp.gt.f32.partialorder %v1504, 0.0
        %v1510 = vmul.f32 %v1504, 0.2
        %v1511 = vsel %vm1509, %v1504, %v1510
        %v1512 = vpack.c.bf16 %v1511, %v1511
        %v1513 = vld [vmem:[%s11] sm:$0xf]
        %v1514 = vld [vmem:[%s11 + $0x4] sm:$0xf]
        %v1515 = vld [vmem:[%s11 + $0x8] sm:$0xf]
        %v1516 = vld [vmem:[%s11 + $0xc] sm:$0xf]
        %v1517 = vld [vmem:[%s11 + $0x10] sm:$0xf]
        %v1518 = vld [vmem:[%s11 + $0x14] sm:$0xf]
        %v1519 = vld [vmem:[%s11 + $0x18] sm:$0xf]
        %v1520 = vld [vmem:[%s11 + $0x1c] sm:$0xf]
        %v1521 = vld [vmem:[%s11 + $0x20] sm:$0xf]
        %v1522 = vld [vmem:[%s11 + $0x24] sm:$0xf]
        %v1523 = vld [vmem:[%s11 + $0x28] sm:$0xf]
        %v1524 = vld [vmem:[%s11 + $0x2c] sm:$0xf]
        %v1525 = vld [vmem:[%s11 + $0x30] sm:$0xf]
        %v1526 = vld [vmem:[%s11 + $0x34] sm:$0xf]
        %v1527 = vld [vmem:[%s11 + $0x38] sm:$0xf]
        %v1528 = vld [vmem:[%s11 + $0x3c] sm:$0xf]
        %v1529 = vld [vmem:[%s12] sm:$0x1]
        %v1546 = vunpack.c.l.b16 %v1513
        %v1547 = vunpack.c.l.b16 %v1514
        %v1548 = vunpack.c.l.b16 %v1515
        %v1549 = vunpack.c.l.b16 %v1516
        %v1550 = vunpack.c.l.b16 %v1517
        %v1551 = vunpack.c.l.b16 %v1518
        %v1552 = vunpack.c.l.b16 %v1519
        %v1553 = vunpack.c.l.b16 %v1520
        %v1554 = vunpack.c.l.b16 %v1521
        %v1555 = vunpack.c.l.b16 %v1522
        %v1556 = vunpack.c.l.b16 %v1523
        %v1557 = vunpack.c.l.b16 %v1524
        %v1558 = vunpack.c.l.b16 %v1525
        %v1559 = vunpack.c.l.b16 %v1526
        %v1560 = vunpack.c.l.b16 %v1527
        %v1561 = vunpack.c.l.b16 %v1528
        %v1562 = vpack.c.b16 %v1547, %v1546
        %v1563 = vpack.c.b16 %v1549, %v1548
        %v1564 = vpack.c.b16 %v1551, %v1550
        %v1565 = vpack.c.b16 %v1553, %v1552
        %v1566 = vpack.c.b16 %v1555, %v1554
        %v1567 = vpack.c.b16 %v1557, %v1556
        %v1568 = vpack.c.b16 %v1559, %v1558
        %v1569 = vpack.c.b16 %v1561, %v1560
        %1578 = vmatprep.subr.bf16.mxu0 0
        %1579 = vmatpush1.bf16.msra.mxu0 %v1562
        %1580 = vmatprep.subr.bf16.mxu0 0
        %1581 = vmatpush1.bf16.msra.mxu0 %v1563
        %1582 = vmatprep.subr.bf16.mxu0 0
        %1583 = vmatpush1.bf16.msra.mxu0 %v1564
        %1584 = vmatprep.subr.bf16.mxu0 0
        %1585 = vmatpush1.bf16.msra.mxu0 %v1565
        %1586 = vmatprep.subr.bf16.mxu0 0
        %1587 = vmatpush1.bf16.msra.mxu0 %v1566
        %1588 = vmatprep.subr.bf16.mxu0 0
        %1589 = vmatpush1.bf16.msra.mxu0 %v1567
        %1590 = vmatprep.subr.bf16.mxu0 0
        %1591 = vmatpush1.bf16.msra.mxu0 %v1568
        %1592 = vmatprep.subr.bf16.mxu0 0
        %1593 = vmatpush1.bf16.msra.mxu0 %v1569
        %1594 = vmatprep.subr.bf16.mxu0 0
        %1595 = vmatpush1.bf16.msra.mxu0 0
        %1596 = vmatprep.subr.bf16.mxu0 0
        %1597 = vmatpush1.bf16.msra.mxu0 0
        %1598 = vmatprep.subr.bf16.mxu0 0
        %1599 = vmatpush1.bf16.msra.mxu0 0
        %1600 = vmatprep.subr.bf16.mxu0 0
        %1601 = vmatpush1.bf16.msra.mxu0 0
        %1602 = vmatprep.subr.bf16.mxu0 0
        %1603 = vmatpush1.bf16.msra.mxu0 0
        %1604 = vmatprep.subr.bf16.mxu0 0
        %1605 = vmatpush1.bf16.msra.mxu0 0
        %1606 = vmatprep.subr.bf16.mxu0 0
        %1607 = vmatpush1.bf16.msra.mxu0 0
        %1608 = vmatprep.subr.bf16.mxu0 0
        %1609 = vmatpush1.bf16.msra.mxu0 0
        %1610 = vmatprep.mubr.bf16.mxu0 0
        %1611 = vmatmul.mubr.bf16.gmra.mrb[0].mxu0 %v1512
        %v1612 = vpop.f32.mrb[0].mxu0
        %v1613 = vadd.f32 %v1529, %v1612
        %v1614 = vpop.f32.mrb[0].mxu0
        %v1615 = vpop.f32.mrb[0].mxu0
        %v1616 = vpop.f32.mrb[0].mxu0
        %1617 = vdwg.mxu0
        %vm1618 = vcmp.gt.f32.partialorder %v1613, 0.0
        %v1619 = vmul.f32 %v1613, 0.2
        %v1620 = vsel %vm1618, %v1613, %v1619
        %v1621 = vpack.c.bf16 %v1620, %v1620
        %v1622 = vld [vmem:[%s13] sm:$0xf]
        %v1623 = vld [vmem:[%s13 + $0x4] sm:$0xf]
        %v1624 = vld [vmem:[%s13 + $0x8] sm:$0xf]
        %v1625 = vld [vmem:[%s13 + $0xc] sm:$0xf]
        %v1626 = vld [vmem:[%s13 + $0x10] sm:$0xf]
        %v1627 = vld [vmem:[%s13 + $0x14] sm:$0xf]
        %v1628 = vld [vmem:[%s13 + $0x18] sm:$0xf]
        %v1629 = vld [vmem:[%s13 + $0x1c] sm:$0xf]
        %v1630 = vld [vmem:[%s14] sm:$0x1]
        %v1639 = vunpack.c.l.b16 %v1622
        %v1640 = vunpack.c.l.b16 %v1623
        %v1641 = vunpack.c.l.b16 %v1624
        %v1642 = vunpack.c.l.b16 %v1625
        %v1643 = vunpack.c.l.b16 %v1626
        %v1644 = vunpack.c.l.b16 %v1627
        %v1645 = vunpack.c.l.b16 %v1628
        %v1646 = vunpack.c.l.b16 %v1629
        %v1647 = vpack.c.b16 %v1640, %v1639
        %v1648 = vpack.c.b16 %v1642, %v1641
        %v1649 = vpack.c.b16 %v1644, %v1643
        %v1650 = vpack.c.b16 %v1646, %v1645
        %v1656 = vsel %vm637, %v1621, 0
        %1658 = vmatprep.subr.bf16.mxu0 0
        %1659 = vmatpush1.bf16.msra.mxu0 %v1647
        %1660 = vmatprep.subr.bf16.mxu0 0
        %1661 = vmatpush1.bf16.msra.mxu0 %v1648
        %1662 = vmatprep.subr.bf16.mxu0 0
        %1663 = vmatpush1.bf16.msra.mxu0 %v1649
        %1664 = vmatprep.subr.bf16.mxu0 0
        %1665 = vmatpush1.bf16.msra.mxu0 %v1650
        %1666 = vmatprep.subr.bf16.mxu0 0
        %1667 = vmatpush1.bf16.msra.mxu0 0
        %1668 = vmatprep.subr.bf16.mxu0 0
        %1669 = vmatpush1.bf16.msra.mxu0 0
        %1670 = vmatprep.subr.bf16.mxu0 0
        %1671 = vmatpush1.bf16.msra.mxu0 0
        %1672 = vmatprep.subr.bf16.mxu0 0
        %1673 = vmatpush1.bf16.msra.mxu0 0
        %1674 = vmatprep.subr.bf16.mxu0 0
        %1675 = vmatpush1.bf16.msra.mxu0 0
        %1676 = vmatprep.subr.bf16.mxu0 0
        %1677 = vmatpush1.bf16.msra.mxu0 0
        %1678 = vmatprep.subr.bf16.mxu0 0
        %1679 = vmatpush1.bf16.msra.mxu0 0
        %1680 = vmatprep.subr.bf16.mxu0 0
        %1681 = vmatpush1.bf16.msra.mxu0 0
        %1682 = vmatprep.subr.bf16.mxu0 0
        %1683 = vmatpush1.bf16.msra.mxu0 0
        %1684 = vmatprep.subr.bf16.mxu0 0
        %1685 = vmatpush1.bf16.msra.mxu0 0
        %1686 = vmatprep.subr.bf16.mxu0 0
        %1687 = vmatpush1.bf16.msra.mxu0 0
        %1688 = vmatprep.subr.bf16.mxu0 0
        %1689 = vmatpush1.bf16.msra.mxu0 0
        %1690 = vmatprep.mubr.bf16.mxu0 0
        %1691 = vmatmul.mubr.bf16.gmra.mrb[0].mxu0 %v1656
        %v1692 = vpop.f32.mrb[0].mxu0
        %v1693 = vadd.f32 %v1630, %v1692
        %v1694 = vpop.f32.mrb[0].mxu0
        %v1695 = vpop.f32.mrb[0].mxu0
        %v1696 = vpop.f32.mrb[0].mxu0
        %1697 = vdwg.mxu0
        %1698 = vst [vmem:[%s518] sm:$0x1] %v1693
      $region88: #{pointnet_discriminator.1} parent=79 // pred_fallthru
        _
      %p1699 = scmp.lt.s32.totalorder %s30, 1
      %s1700 = scalar_select %p1699, %s30, 1
      %s1701 = scalar_lea.vmem %s15, %s1700
      // Predicated region
      $region89: #{pointnet_discriminator.1} parent=79 // pred_check
        %p1702 = pneg %p378
      $region90: #{pointnet_discriminator.1} parent=79 // pred_check_branch
        %1704 = sbr.rel (%p1702) target = $region92
      $region91: #{pointnet_discriminator.1} parent=79 // pred_region
        _
      $region92: #{pointnet_discriminator.1} parent=79 // pred_fallthru
        _
    $region80: #{pointnet_discriminator.1} parent=5 // pred_fallthru
      _
    %p1705 = scmp.le.s32.totalorder 2, %s21
    // Predicated region
    $region93: #{pointnet_discriminator.1} parent=5 // pred_check
      %p1706 = pneg %p1705
    $region94: #{pointnet_discriminator.1} parent=5 // pred_check_branch
      %1708 = sbr.rel (%p1706) target = $region96
    $region95: #{pointnet_discriminator.1} parent=5 // pred_region
      %s1709 = ssub.s32 %s21, 2
      // Predicated region
      $region97: #{pointnet_discriminator.1} parent=95 // pred_check
        %p1710 = pneg %p384
      $region98: #{pointnet_discriminator.1} parent=95 // pred_check_branch
        %1712 = sbr.rel (%p1710) target = $region100
      $region99: #{pointnet_discriminator.1} parent=95 // pred_region
        %p1713 = scmp.lt.s32.totalorder %s32, 1
        %s1714 = scalar_select %p1713, %s32, 1
        %s1715 = scalar_lea.vmem %s15, %s1714
      $region100: #{pointnet_discriminator.1} parent=95 // pred_fallthru
        _
    $region96: #{pointnet_discriminator.1} parent=5 // pred_fallthru
      _
  $region6: #{pointnet_discriminator.1} parent=0 // loop_footer
    %s25 = sadd.s32 1, %s21
  $region7: #{pointnet_discriminator.1} parent=0 // loop_footer_branch
    %20 = sbr.rel target = $region3
  $region8: #{pointnet_discriminator.1} parent=0 // loop_exit
    _

</llo_original>
